<compile_context>
chip_gen: v7x
topology: tpu7x:2x2x1
jax: 0.10.0
libtpu: 0.0.40
codegen_flags: <defaults>
</compile_context>

<pallas_src>
import jax
import jax.numpy as jnp
from jax.experimental import pallas as pl
from jax.experimental.pallas import tpu as pltpu


def _round_up(x, m):
    return (x + m - 1) // m * m


# ----------------------------- Pallas kernel ---------------------------------
def _make_kernel(tl, k, d, p, halo, cp, optional, last):
    """tl: output rows per tile; k: kernel size; d: dilation; p = d*(k-1);
    halo: 8-aligned left-halo rows (>= 2p); cp: padded (lane-dense) channels."""
    off = halo - 2 * p          # first window row used by layer-1 tap 0
    rows1 = tl + p              # layer-1 rows = tile rows + layer-2 left halo

    def kernel(xh_ref, xb_ref, w1_ref, w2_ref, wr_ref, b_ref, o_ref, h1_ref):
        f32 = jnp.float32
        bf16 = jnp.bfloat16
        first = pl.program_id(1) == 0
        b = b_ref[...]                        # (3, cp) f32: [b1, b2, br]
        xh = xh_ref[0, 0]                     # (halo, cin) bf16 left halo
        xb = xb_ref[0]                        # (tl,  cin)  bf16 tile body
        xw = jnp.concatenate([xh, xb], axis=0)        # (halo + tl, cin)

        # ---- layer 1: causal dilated conv as ONE wide-K (k*cin) matmul -------
        if k > 1:
            x1 = jnp.concatenate(
                [xw[off + t * d: off + t * d + rows1, :] for t in range(k)],
                axis=1)
        else:
            x1 = xw[off: off + rows1, :]
        y1 = jnp.dot(x1, w1_ref[...], preferred_element_type=f32) + b[0:1, :]
        h1_ref[...] = jnp.maximum(y1, 0.0).astype(bf16)

        if p > 0:
            @pl.when(first)
            def _():
                # ConstantPad1d is applied to the conv OUTPUT: the first 2p
                # global rows of (layer-2-halo'd) h1 are exactly zero.
                h1_ref[0:2 * p, :] = jnp.zeros((2 * p, cp), bf16)

        # ---- layer 2: wide-K matmul over the bf16 h1 scratch ------------------
        if k > 1:
            x2 = jnp.concatenate(
                [h1_ref[t * d: t * d + tl, :] for t in range(k)], axis=1)
        else:
            x2 = h1_ref[0:tl, :]
        y2 = jnp.dot(x2, w2_ref[...], preferred_element_type=f32) + b[1:2, :]
        h2 = y2 if last else jnp.maximum(y2, 0.0)

        # ---- optional 1x1-conv skip path (reuses the body block directly) ----
        if optional:
            r = jnp.dot(xb, wr_ref[...], preferred_element_type=f32) + b[2:3, :]
            o_ref[0] = (h2 + r).astype(o_ref.dtype)
        else:
            o_ref[0] = h2.astype(o_ref.dtype)

        if p > 0:
            @pl.when(first)
            def _():
                # First p global output rows: the conv branch is hard-zeroed by
                # the post-conv ConstantPad1d, so only the skip path remains.
                if optional:
                    o_ref[0, 0:p, :] = r[0:p, :].astype(o_ref.dtype)
                else:
                    o_ref[0, 0:p, :] = jnp.zeros((p, cp), o_ref.dtype)

    return kernel


# ------------------------------ wrappers --------------------------------------
def residual_block_i_nlc(x_nlc, params, *, kernel_size, dilation,
                         optional=True, last=False, tl=None,
                         out_dtype=jnp.float32):
    """x_nlc: (N, L, Cin) -> (N, L, Cout); channels live on the lane axis."""
    N, L, Cin = x_nlc.shape
    k, d = kernel_size, dilation
    p = d * (k - 1)
    Cout = params["b1"].shape[0]
    Cp = _round_up(Cout, 128)                 # lane-dense output channels
    halo = max(8, _round_up(2 * p, 8))        # 8-aligned causal (left-only) halo

    # ---- tile size: big enough to amortize per-step overhead, small enough for
    #      the v7x scoped-VMEM budget, and >= 2 L-tiles when N == 1 so both v7x
    #      TensorCores get fed by the ("parallel", "parallel") grid. ------------
    if tl is None:
        tl = 1024 if Cp <= 256 else 256
        if N == 1:
            tl = min(tl, max(8, _round_up(-(-L // 2), 8)))
        tl = min(tl, max(8, _round_up(L, 8)))
    tl = max(halo, _round_up(max(tl, 8), 8))
    nt = -(-L // tl)
    l_pad = nt * tl

    # ---- fold weight_norm'd conv weights into bf16 matmul slabs (one-time) ----
    bf16 = jnp.bfloat16

    def pad_cout(w):
        return jnp.pad(w, ((0, Cp - Cout),) + ((0, 0),) * (w.ndim - 1))

    w1 = pad_cout(params["w1"])                                         # (Cp,Cin,k)
    w2 = jnp.pad(params["w2"], ((0, Cp - Cout), (0, Cp - Cout), (0, 0)))
    w1cat = jnp.concatenate([w1[:, :, t].T for t in range(k)], axis=0).astype(bf16)
    w2cat = jnp.concatenate([w2[:, :, t].T for t in range(k)], axis=0).astype(bf16)
    if optional:
        wr2d = pad_cout(params["wr"])[:, :, 0].T.astype(bf16)           # (Cin,Cp)
        br = params["br"]
    else:
        wr2d = jnp.zeros((Cin, Cp), bf16)
        br = jnp.zeros((Cout,), jnp.float32)
    bias = jnp.stack([jnp.pad(v.astype(jnp.float32), (0, Cp - Cout))
                      for v in (params["b1"], params["b2"], br)])        # (3,Cp)

    # ---- input: bf16 body (non-overlapping tiles) + tiny per-tile left halo ---
    x32 = x_nlc.astype(jnp.float32)
    xb = jnp.pad(x32, ((0, 0), (0, l_pad - L), (0, 0))).astype(bf16)     # (N,l_pad,Cin)
    xh = jnp.pad(x32, ((0, 0), (halo, max(0, l_pad - L - halo)), (0, 0))).astype(bf16)
    xh = xh[:, :l_pad, :].reshape(N, nt, tl, Cin)[:, :, :halo, :]        # (N,nt,halo,Cin)

    # ---- VMEM footprint -> scoped-vmem limit (v7x-safe cap) --------------------
    ob = jnp.dtype(out_dtype).itemsize
    est = (2 * (tl + halo) * Cin * 2                         # x body + halo (2 bufs)
           + (k * Cin + k * Cp + Cin) * Cp * 2 + 3 * Cp * 8  # weights + bias
           + 2 * tl * Cp * ob                                # output (2 bufs)
           + (tl + p) * Cp * 2                               # h1 scratch (bf16)
           + (tl + halo) * Cin * 2                           # xw temp
           + k * (tl + p) * Cin * 2 + k * tl * Cp * 2        # x1 / x2 temps
           + (tl + p) * Cp * 4 + 2 * tl * Cp * 4)            # f32 temporaries
    vmem_limit = int(max(32 << 20, min(56 << 20, est * 2)))

    kern = _make_kernel(tl, k, d, p, halo, Cp, optional, last)

    def _call(single_buffer_weights):
        def const_spec(shape):
            idx = lambda n, t: (0,) * len(shape)
            if single_buffer_weights:
                # grid-invariant operands: DMA'd once, no double-buffer VMEM cost
                return pl.BlockSpec(shape, idx, pipeline_mode=pl.Buffered(1))
            return pl.BlockSpec(shape, idx)

        return pl.pallas_call(
            kern,
            out_shape=jax.ShapeDtypeStruct((N, l_pad, Cp), out_dtype),
            grid=(N, nt),
            in_specs=[
                pl.BlockSpec((1, 1, halo, Cin), lambda n, t: (n, t, 0, 0)),  # halo
                pl.BlockSpec((1, tl, Cin), lambda n, t: (n, t, 0)),          # body
                const_spec((k * Cin, Cp)),                                   # W1
                const_spec((k * Cp, Cp)),                                    # W2
                const_spec((Cin, Cp)),                                       # Wr
                const_spec((3, Cp)),                                         # biases
            ],
            out_specs=pl.BlockSpec((1, tl, Cp), lambda n, t: (n, t, 0)),
            scratch_shapes=[pltpu.VMEM((tl + p, Cp), jnp.bfloat16)],
            compiler_params=pltpu.CompilerParams(
                dimension_semantics=("parallel", "parallel"),
                vmem_limit_bytes=vmem_limit),
        )(xh, xb, w1cat, w2cat, wr2d, bias)

    try:
        out = _call(True)
    except Exception:            # older JAX without BlockSpec.pipeline_mode
        out = _call(False)

    if l_pad == L and Cp == Cout:
        return out
    return out[:, :L, :Cout]


def residual_block_i(x_ncl, params, *, kernel_size, dilation,
                     optional=True, last=False, tl=None, out_dtype=jnp.float32):
    """PyTorch-layout entry point: x_ncl (N, Cin, L) -> (N, Cout, L)."""
    out_nlc = residual_block_i_nlc(
        jnp.transpose(x_ncl, (0, 2, 1)), params,
        kernel_size=kernel_size, dilation=dilation,
        optional=optional, last=last, tl=tl, out_dtype=out_dtype)
    return jnp.transpose(out_nlc, (0, 2, 1))


# ---------------- pure-JAX references (for correctness check) -----------------
def _q(a):
    return a.astype(jnp.bfloat16).astype(jnp.float32)


def reference(x_ncl, params, *, kernel_size, dilation, optional=True, last=False,
              emulate_bf16=True):
    k, d = kernel_size, dilation
    p = d * (k - 1)
    q = _q if emulate_bf16 else (lambda a: a)
    x = q(x_ncl.astype(jnp.float32))

    def dconv(inp, w, b):  # 'valid' dilated conv, torch weight layout (O,I,k)
        lv = inp.shape[-1] - p
        y = sum(jnp.einsum("ncl,oc->nol", inp[:, :, t * d: t * d + lv],
                           q(w[:, :, t]), preferred_element_type=jnp.float32)
                for t in range(k))
        return y + b[None, :, None]

    y1 = jnp.pad(dconv(x, params["w1"], params["b1"]), ((0, 0), (0, 0), (p, 0)))
    h1 = q(jnp.maximum(y1, 0.0))
    y2 = jnp.pad(dconv(h1, params["w2"], params["b2"]), ((0, 0), (0, 0), (p, 0)))
    h2 = y2 if last else jnp.maximum(y2, 0.0)
    if optional:
        h2 = h2 + (jnp.einsum("ncl,oc->nol", x, q(params["wr"][:, :, 0]),
                              preferred_element_type=jnp.float32)
                   + params["br"][None, :, None])
    return h2


def make_params(key, cin, cout, k):
    """weight_norm'd conv params folded to effective weights (torch layout)."""
    keys = jax.random.split(key, 6)

    def weight_norm(kk, shape):
        v = jax.random.normal(kk, shape, jnp.float32)
        g = 0.5 + jax.random.uniform(jax.random.fold_in(kk, 1),
                                     (shape[0],), jnp.float32)
        norm = jnp.sqrt(jnp.sum(v * v, axis=(1, 2), keepdims=True))
        return g[:, None, None] * v / norm       # w_eff = g * v / ||v||

    return {
        "w1": weight_norm(keys[0], (cout, cin, k)),
        "b1": jax.random.normal(keys[1], (cout,), jnp.float32) * 0.1,
        "w2": weight_norm(keys[2], (cout, cout, k)),
        "b2": jax.random.normal(keys[3], (cout,), jnp.float32) * 0.1,
        "wr": jax.random.normal(keys[4], (cout, cin, 1), jnp.float32) * 0.3,
        "br": jax.random.normal(keys[5], (cout,), jnp.float32) * 0.1,
    }


if __name__ == "__main__":
    N, Cin, L, Cout = 2, 4, 16, 32
    k, d = 3, 2                      # kernel_size=3, dilation=2 -> halo p=4
    key = jax.random.PRNGKey(0)
    kx, kp = jax.random.split(key)
    x = jax.random.normal(kx, (N, Cin, L), jnp.float32)
    params = make_params(kp, Cin, Cout, k)

    # tl=8 so L=16 exercises the multi-tile + halo + pl.when-gated-mask path.
    out = jax.block_until_ready(
        residual_block_i(x, params, kernel_size=k, dilation=d,
                         optional=True, last=False, tl=8))
    ref_q = jax.block_until_ready(
        reference(x, params, kernel_size=k, dilation=d,
                  optional=True, last=False, emulate_bf16=True))
    ref_f = jax.block_until_ready(
        reference(x, params, kernel_size=k, dilation=d,
                  optional=True, last=False, emulate_bf16=False))

    assert out.shape == (N, Cout, L), out.shape
    err_q = float(jnp.max(jnp.abs(out - ref_q)))   # vs bf16-emulated reference
    err_f = float(jnp.max(jnp.abs(out - ref_f)))   # vs pure f32 reference
    assert err_q < 2e-3, ("bf16-emulated mismatch", err_q)
    assert err_f < 1e-1, ("f32 reference mismatch", err_f)
    print("KERNEL_OK")
</pallas_src>

<mosaic_0001>
module attributes {stable_mosaic.version = 11 : i64} {
  func.func @kernel(%arg0: i32, %arg1: i32, %arg2: memref<1x1x8x4xbf16, #tpu.memory_space<vmem>>, %arg3: memref<1x8x4xbf16, #tpu.memory_space<vmem>>, %arg4: memref<12x128xbf16, #tpu.memory_space<vmem>>, %arg5: memref<384x128xbf16, #tpu.memory_space<vmem>>, %arg6: memref<4x128xbf16, #tpu.memory_space<vmem>>, %arg7: memref<3x128xf32, #tpu.memory_space<vmem>>, %arg8: memref<1x8x128xf32, #tpu.memory_space<vmem>>, %arg9: memref<12x128xbf16, #tpu.memory_space<vmem>>) attributes {dimension_semantics = [#tpu.dimension_semantics<parallel>, #tpu.dimension_semantics<parallel>], iteration_bounds = array<i64: 2, 2>, scalar_prefetch = 0 : i64, scratch_operands = 1 : i64, tpu.core_type = #tpu.core_type<tc>, window_params = [{transform_indices = @transform_0, window_bounds = array<i64: 1, 1, 8, 4>}, {transform_indices = @transform_1, window_bounds = array<i64: 1, 8, 4>}, {pipeline_mode = #tpu.pipeline_mode<synchronous>, transform_indices = @transform_2, window_bounds = array<i64: 12, 128>}, {pipeline_mode = #tpu.pipeline_mode<synchronous>, transform_indices = @transform_3, window_bounds = array<i64: 384, 128>}, {pipeline_mode = #tpu.pipeline_mode<synchronous>, transform_indices = @transform_4, window_bounds = array<i64: 4, 128>}, {pipeline_mode = #tpu.pipeline_mode<synchronous>, transform_indices = @transform_5, window_bounds = array<i64: 3, 128>}, {transform_indices = @transform_6, window_bounds = array<i64: 1, 8, 128>}]} {
    %c0_i32 = arith.constant 0 : i32
    %0 = arith.cmpi eq, %arg1, %c0_i32 : i32
    %c0 = arith.constant 0 : index
    %c0_0 = arith.constant 0 : index
    %1 = vector.load %arg7[%c0, %c0_0] : memref<3x128xf32, #tpu.memory_space<vmem>>, vector<3x128xf32>
    %c0_1 = arith.constant 0 : index
    %c0_2 = arith.constant 0 : index
    %c0_3 = arith.constant 0 : index
    %c0_4 = arith.constant 0 : index
    %2 = vector.load %arg2[%c0_1, %c0_2, %c0_3, %c0_4] : memref<1x1x8x4xbf16, #tpu.memory_space<vmem>>, vector<1x1x8x4xbf16>
    %3 = vector.shape_cast %2 : vector<1x1x8x4xbf16> to vector<8x4xbf16>
    %c0_5 = arith.constant 0 : index
    %c0_6 = arith.constant 0 : index
    %c0_7 = arith.constant 0 : index
    %4 = vector.load %arg3[%c0_5, %c0_6, %c0_7] : memref<1x8x4xbf16, #tpu.memory_space<vmem>>, vector<1x8x4xbf16>
    %5 = vector.shape_cast %4 : vector<1x8x4xbf16> to vector<8x4xbf16>
    %6 = tpu.concatenate %3, %5 in 0 : vector<8x4xbf16>, vector<8x4xbf16> -> vector<16x4xbf16>
    %7 = vector.extract_strided_slice %6 {offsets = [0, 0], sizes = [12, 4], strides = [1, 1]} : vector<16x4xbf16> to vector<12x4xbf16>
    %8 = vector.extract_strided_slice %6 {offsets = [2, 0], sizes = [12, 4], strides = [1, 1]} : vector<16x4xbf16> to vector<12x4xbf16>
    %9 = vector.extract_strided_slice %6 {offsets = [4, 0], sizes = [12, 4], strides = [1, 1]} : vector<16x4xbf16> to vector<12x4xbf16>
    %10 = tpu.concatenate %7, %8, %9 in 1 : vector<12x4xbf16>, vector<12x4xbf16>, vector<12x4xbf16> -> vector<12x12xbf16>
    %c0_8 = arith.constant 0 : index
    %c0_9 = arith.constant 0 : index
    %11 = vector.load %arg4[%c0_8, %c0_9] : memref<12x128xbf16, #tpu.memory_space<vmem>>, vector<12x128xbf16>
    %cst = arith.constant dense<0.000000e+00> : vector<12x128xf32>
    %12 = tpu.matmul %10, %11, %cst {dimension_numbers = #tpu.dot_dimension_numbers<[1], [0], [0], [1], [0, 0, 1, 1], [], []>} : vector<12x12xbf16>, vector<12x128xbf16>, vector<12x128xf32> -> vector<12x128xf32>
    %13 = vector.extract_strided_slice %1 {offsets = [0, 0], sizes = [1, 128], strides = [1, 1]} : vector<3x128xf32> to vector<1x128xf32>
    %14 = vector.broadcast %13 : vector<1x128xf32> to vector<12x128xf32>
    %15 = arith.addf %12, %14 : vector<12x128xf32>
    %cst_10 = arith.constant 0.000000e+00 : f32
    %16 = vector.broadcast %cst_10 : f32 to vector<12x128xf32>
    %17 = arith.maximumf %15, %16 : vector<12x128xf32>
    %18 = arith.truncf %17 : vector<12x128xf32> to vector<12x128xbf16>
    %c0_11 = arith.constant 0 : index
    %c0_12 = arith.constant 0 : index
    %19 = vector.load %arg9[%c0_11, %c0_12] : memref<12x128xbf16, #tpu.memory_space<vmem>>, vector<12x128xbf16>
    tpu.vector_store %arg9[%c0_11, %c0_12], %18 {strides = array<i32>} : memref<12x128xbf16, #tpu.memory_space<vmem>>, vector<12x128xbf16>,
    %20 = arith.extui %0 : i1 to i32
    %c0_i32_13 = arith.constant 0 : i32
    %21 = arith.cmpi ne, %20, %c0_i32_13 : i32
    scf.if %21 {
      %cst_29 = arith.constant 0.000000e+00 : bf16
      %44 = vector.broadcast %cst_29 : bf16 to vector<8x128xbf16>
      %c0_30 = arith.constant 0 : index
      %c0_31 = arith.constant 0 : index
      %45 = vector.load %arg9[%c0_30, %c0_31] : memref<12x128xbf16, #tpu.memory_space<vmem>>, vector<8x128xbf16>
      tpu.vector_store %arg9[%c0_30, %c0_31], %44 {strides = array<i32>} : memref<12x128xbf16, #tpu.memory_space<vmem>>, vector<8x128xbf16>,
    } else {
    }
    %c0_14 = arith.constant 0 : index
    %c0_15 = arith.constant 0 : index
    %22 = vector.load %arg9[%c0_14, %c0_15] : memref<12x128xbf16, #tpu.memory_space<vmem>>, vector<8x128xbf16>
    %c2 = arith.constant 2 : index
    %c0_16 = arith.constant 0 : index
    %23 = vector.load %arg9[%c2, %c0_16] : memref<12x128xbf16, #tpu.memory_space<vmem>>, vector<8x128xbf16>
    %c4 = arith.constant 4 : index
    %c0_17 = arith.constant 0 : index
    %24 = vector.load %arg9[%c4, %c0_17] : memref<12x128xbf16, #tpu.memory_space<vmem>>, vector<8x128xbf16>
    %25 = tpu.concatenate %22, %23, %24 in 1 : vector<8x128xbf16>, vector<8x128xbf16>, vector<8x128xbf16> -> vector<8x384xbf16>
    %c0_18 = arith.constant 0 : index
    %c0_19 = arith.constant 0 : index
    %26 = vector.load %arg5[%c0_18, %c0_19] : memref<384x128xbf16, #tpu.memory_space<vmem>>, vector<384x128xbf16>
    %cst_20 = arith.constant dense<0.000000e+00> : vector<8x128xf32>
    %27 = tpu.matmul %25, %26, %cst_20 {dimension_numbers = #tpu.dot_dimension_numbers<[1], [0], [0], [1], [0, 0, 1, 1], [], []>} : vector<8x384xbf16>, vector<384x128xbf16>, vector<8x128xf32> -> vector<8x128xf32>
    %28 = vector.extract_strided_slice %1 {offsets = [1, 0], sizes = [1, 128], strides = [1, 1]} : vector<3x128xf32> to vector<1x128xf32>
    %29 = vector.broadcast %28 : vector<1x128xf32> to vector<8x128xf32>
    %30 = arith.addf %27, %29 : vector<8x128xf32>
    %cst_21 = arith.constant 0.000000e+00 : f32
    %31 = vector.broadcast %cst_21 : f32 to vector<8x128xf32>
    %32 = arith.maximumf %30, %31 : vector<8x128xf32>
    %c0_22 = arith.constant 0 : index
    %c0_23 = arith.constant 0 : index
    %33 = vector.load %arg6[%c0_22, %c0_23] : memref<4x128xbf16, #tpu.memory_space<vmem>>, vector<4x128xbf16>
    %cst_24 = arith.constant dense<0.000000e+00> : vector<8x128xf32>
    %34 = tpu.matmul %5, %33, %cst_24 {dimension_numbers = #tpu.dot_dimension_numbers<[1], [0], [0], [1], [0, 0, 1, 1], [], []>} : vector<8x4xbf16>, vector<4x128xbf16>, vector<8x128xf32> -> vector<8x128xf32>
    %35 = vector.extract_strided_slice %1 {offsets = [2, 0], sizes = [1, 128], strides = [1, 1]} : vector<3x128xf32> to vector<1x128xf32>
    %36 = vector.broadcast %35 : vector<1x128xf32> to vector<8x128xf32>
    %37 = arith.addf %34, %36 : vector<8x128xf32>
    %38 = arith.addf %32, %37 : vector<8x128xf32>
    %c0_25 = arith.constant 0 : index
    %c0_26 = arith.constant 0 : index
    %c0_27 = arith.constant 0 : index
    %39 = vector.load %arg8[%c0_25, %c0_26, %c0_27] : memref<1x8x128xf32, #tpu.memory_space<vmem>>, vector<1x8x128xf32>
    %40 = vector.shape_cast %39 : vector<1x8x128xf32> to vector<8x128xf32>
    %41 = vector.shape_cast %38 : vector<8x128xf32> to vector<1x8x128xf32>
    tpu.vector_store %arg8[%c0_25, %c0_26, %c0_27], %41 {strides = array<i32>} : memref<1x8x128xf32, #tpu.memory_space<vmem>>, vector<1x8x128xf32>,
    %42 = arith.extui %0 : i1 to i32
    %c0_i32_28 = arith.constant 0 : i32
    %43 = arith.cmpi ne, %42, %c0_i32_28 : i32
    scf.if %43 {
      %44 = vector.extract_strided_slice %37 {offsets = [0, 0], sizes = [4, 128], strides = [1, 1]} : vector<8x128xf32> to vector<4x128xf32>
      %c0_29 = arith.constant 0 : index
      %c0_30 = arith.constant 0 : index
      %c0_31 = arith.constant 0 : index
      %45 = vector.load %arg8[%c0_29, %c0_30, %c0_31] : memref<1x8x128xf32, #tpu.memory_space<vmem>>, vector<1x4x128xf32>
      %46 = vector.shape_cast %45 : vector<1x4x128xf32> to vector<4x128xf32>
      %47 = vector.shape_cast %44 : vector<4x128xf32> to vector<1x4x128xf32>
      tpu.vector_store %arg8[%c0_29, %c0_30, %c0_31], %47 {strides = array<i32>} : memref<1x8x128xf32, #tpu.memory_space<vmem>>, vector<1x4x128xf32>,
    } else {
    }
    return
  }
  func.func @transform_0(%arg0: i32, %arg1: i32) -> (i32, i32, i32, i32) {
    %c0_i32 = arith.constant 0 : i32
    %c0_i32_0 = arith.constant 0 : i32
    %c0_i32_1 = arith.constant 0 : i32
    return %arg0, %arg1, %c0_i32, %c0_i32_0 : i32, i32, i32, i32
  }
  func.func @transform_1(%arg0: i32, %arg1: i32) -> (i32, i32, i32) {
    %c0_i32 = arith.constant 0 : i32
    %c0_i32_0 = arith.constant 0 : i32
    return %arg0, %arg1, %c0_i32 : i32, i32, i32
  }
  func.func @transform_2(%arg0: i32, %arg1: i32) -> (i32, i32) {
    %c0_i32 = arith.constant 0 : i32
    %c0_i32_0 = arith.constant 0 : i32
    %c0_i32_1 = arith.constant 0 : i32
    return %c0_i32, %c0_i32_0 : i32, i32
  }
  func.func @transform_3(%arg0: i32, %arg1: i32) -> (i32, i32) {
    %c0_i32 = arith.constant 0 : i32
    %c0_i32_0 = arith.constant 0 : i32
    %c0_i32_1 = arith.constant 0 : i32
    return %c0_i32, %c0_i32_0 : i32, i32
  }
  func.func @transform_4(%arg0: i32, %arg1: i32) -> (i32, i32) {
    %c0_i32 = arith.constant 0 : i32
    %c0_i32_0 = arith.constant 0 : i32
    %c0_i32_1 = arith.constant 0 : i32
    return %c0_i32, %c0_i32_0 : i32, i32
  }
  func.func @transform_5(%arg0: i32, %arg1: i32) -> (i32, i32) {
    %c0_i32 = arith.constant 0 : i32
    %c0_i32_0 = arith.constant 0 : i32
    %c0_i32_1 = arith.constant 0 : i32
    return %c0_i32, %c0_i32_0 : i32, i32
  }
  func.func @transform_6(%arg0: i32, %arg1: i32) -> (i32, i32, i32) {
    %c0_i32 = arith.constant 0 : i32
    %c0_i32_0 = arith.constant 0 : i32
    return %arg0, %arg1, %c0_i32 : i32, i32, i32
  }
}

module attributes {stable_mosaic.version = 11 : i64} {
  func.func @kernel(%arg0: i32, %arg1: i32, %arg2: memref<1x1x8x4xbf16, #tpu.memory_space<vmem>>, %arg3: memref<1x8x4xbf16, #tpu.memory_space<vmem>>, %arg4: memref<12x128xbf16, #tpu.memory_space<vmem>>, %arg5: memref<384x128xbf16, #tpu.memory_space<vmem>>, %arg6: memref<4x128xbf16, #tpu.memory_space<vmem>>, %arg7: memref<3x128xf32, #tpu.memory_space<vmem>>, %arg8: memref<1x8x128xf32, #tpu.memory_space<vmem>>, %arg9: memref<12x128xbf16, #tpu.memory_space<vmem>>) attributes {dimension_semantics = [#tpu.dimension_semantics<parallel>, #tpu.dimension_semantics<parallel>], iteration_bounds = array<i64: 2, 2>, scalar_prefetch = 0 : i64, scratch_operands = 1 : i64, tpu.core_type = #tpu.core_type<tc>, window_params = [{transform_indices = @transform_0, window_bounds = array<i64: 1, 1, 8, 4>}, {transform_indices = @transform_1, window_bounds = array<i64: 1, 8, 4>}, {pipeline_mode = #tpu.pipeline_mode<synchronous>, transform_indices = @transform_2, window_bounds = array<i64: 12, 128>}, {pipeline_mode = #tpu.pipeline_mode<synchronous>, transform_indices = @transform_3, window_bounds = array<i64: 384, 128>}, {pipeline_mode = #tpu.pipeline_mode<synchronous>, transform_indices = @transform_4, window_bounds = array<i64: 4, 128>}, {pipeline_mode = #tpu.pipeline_mode<synchronous>, transform_indices = @transform_5, window_bounds = array<i64: 3, 128>}, {transform_indices = @transform_6, window_bounds = array<i64: 1, 8, 128>}]} {
    %c0_i32 = arith.constant 0 : i32
    %0 = arith.cmpi eq, %arg1, %c0_i32 : i32
    %c0 = arith.constant 0 : index
    %c0_0 = arith.constant 0 : index
    %1 = vector.load %arg7[%c0, %c0_0] : memref<3x128xf32, #tpu.memory_space<vmem>>, vector<3x128xf32>
    %c0_1 = arith.constant 0 : index
    %c0_2 = arith.constant 0 : index
    %c0_3 = arith.constant 0 : index
    %c0_4 = arith.constant 0 : index
    %2 = vector.load %arg2[%c0_1, %c0_2, %c0_3, %c0_4] : memref<1x1x8x4xbf16, #tpu.memory_space<vmem>>, vector<1x1x8x4xbf16>
    %3 = vector.shape_cast %2 : vector<1x1x8x4xbf16> to vector<8x4xbf16>
    %c0_5 = arith.constant 0 : index
    %c0_6 = arith.constant 0 : index
    %c0_7 = arith.constant 0 : index
    %4 = vector.load %arg3[%c0_5, %c0_6, %c0_7] : memref<1x8x4xbf16, #tpu.memory_space<vmem>>, vector<1x8x4xbf16>
    %5 = vector.shape_cast %4 : vector<1x8x4xbf16> to vector<8x4xbf16>
    %6 = tpu.concatenate %3, %5 in 0 : vector<8x4xbf16>, vector<8x4xbf16> -> vector<16x4xbf16>
    %7 = vector.extract_strided_slice %6 {offsets = [0, 0], sizes = [12, 4], strides = [1, 1]} : vector<16x4xbf16> to vector<12x4xbf16>
    %8 = vector.extract_strided_slice %6 {offsets = [2, 0], sizes = [12, 4], strides = [1, 1]} : vector<16x4xbf16> to vector<12x4xbf16>
    %9 = vector.extract_strided_slice %6 {offsets = [4, 0], sizes = [12, 4], strides = [1, 1]} : vector<16x4xbf16> to vector<12x4xbf16>
    %10 = tpu.concatenate %7, %8, %9 in 1 : vector<12x4xbf16>, vector<12x4xbf16>, vector<12x4xbf16> -> vector<12x12xbf16>
    %c0_8 = arith.constant 0 : index
    %c0_9 = arith.constant 0 : index
    %11 = vector.load %arg4[%c0_8, %c0_9] : memref<12x128xbf16, #tpu.memory_space<vmem>>, vector<12x128xbf16>
    %cst = arith.constant dense<0.000000e+00> : vector<12x128xf32>
    %12 = tpu.matmul %10, %11, %cst {dimension_numbers = #tpu.dot_dimension_numbers<[1], [0], [0], [1], [0, 0, 1, 1], [], []>} : vector<12x12xbf16>, vector<12x128xbf16>, vector<12x128xf32> -> vector<12x128xf32>
    %13 = vector.extract_strided_slice %1 {offsets = [0, 0], sizes = [1, 128], strides = [1, 1]} : vector<3x128xf32> to vector<1x128xf32>
    %14 = vector.broadcast %13 : vector<1x128xf32> to vector<12x128xf32>
    %15 = arith.addf %12, %14 : vector<12x128xf32>
    %cst_10 = arith.constant 0.000000e+00 : f32
    %16 = vector.broadcast %cst_10 : f32 to vector<12x128xf32>
    %17 = arith.maximumf %15, %16 : vector<12x128xf32>
    %18 = arith.truncf %17 : vector<12x128xf32> to vector<12x128xbf16>
    %c0_11 = arith.constant 0 : index
    %c0_12 = arith.constant 0 : index
    %19 = vector.load %arg9[%c0_11, %c0_12] : memref<12x128xbf16, #tpu.memory_space<vmem>>, vector<12x128xbf16>
    tpu.vector_store %arg9[%c0_11, %c0_12], %18 {strides = array<i32>} : memref<12x128xbf16, #tpu.memory_space<vmem>>, vector<12x128xbf16>,
    %20 = arith.extui %0 : i1 to i32
    %c0_i32_13 = arith.constant 0 : i32
    %21 = arith.cmpi ne, %20, %c0_i32_13 : i32
    scf.if %21 {
      %cst_29 = arith.constant 0.000000e+00 : bf16
      %44 = vector.broadcast %cst_29 : bf16 to vector<8x128xbf16>
      %c0_30 = arith.constant 0 : index
      %c0_31 = arith.constant 0 : index
      %45 = vector.load %arg9[%c0_30, %c0_31] : memref<12x128xbf16, #tpu.memory_space<vmem>>, vector<8x128xbf16>
      tpu.vector_store %arg9[%c0_30, %c0_31], %44 {strides = array<i32>} : memref<12x128xbf16, #tpu.memory_space<vmem>>, vector<8x128xbf16>,
    } else {
    }
    %c0_14 = arith.constant 0 : index
    %c0_15 = arith.constant 0 : index
    %22 = vector.load %arg9[%c0_14, %c0_15] : memref<12x128xbf16, #tpu.memory_space<vmem>>, vector<8x128xbf16>
    %c2 = arith.constant 2 : index
    %c0_16 = arith.constant 0 : index
    %23 = vector.load %arg9[%c2, %c0_16] : memref<12x128xbf16, #tpu.memory_space<vmem>>, vector<8x128xbf16>
    %c4 = arith.constant 4 : index
    %c0_17 = arith.constant 0 : index
    %24 = vector.load %arg9[%c4, %c0_17] : memref<12x128xbf16, #tpu.memory_space<vmem>>, vector<8x128xbf16>
    %25 = tpu.concatenate %22, %23, %24 in 1 : vector<8x128xbf16>, vector<8x128xbf16>, vector<8x128xbf16> -> vector<8x384xbf16>
    %c0_18 = arith.constant 0 : index
    %c0_19 = arith.constant 0 : index
    %26 = vector.load %arg5[%c0_18, %c0_19] : memref<384x128xbf16, #tpu.memory_space<vmem>>, vector<384x128xbf16>
    %cst_20 = arith.constant dense<0.000000e+00> : vector<8x128xf32>
    %27 = tpu.matmul %25, %26, %cst_20 {dimension_numbers = #tpu.dot_dimension_numbers<[1], [0], [0], [1], [0, 0, 1, 1], [], []>} : vector<8x384xbf16>, vector<384x128xbf16>, vector<8x128xf32> -> vector<8x128xf32>
    %28 = vector.extract_strided_slice %1 {offsets = [1, 0], sizes = [1, 128], strides = [1, 1]} : vector<3x128xf32> to vector<1x128xf32>
    %29 = vector.broadcast %28 : vector<1x128xf32> to vector<8x128xf32>
    %30 = arith.addf %27, %29 : vector<8x128xf32>
    %cst_21 = arith.constant 0.000000e+00 : f32
    %31 = vector.broadcast %cst_21 : f32 to vector<8x128xf32>
    %32 = arith.maximumf %30, %31 : vector<8x128xf32>
    %c0_22 = arith.constant 0 : index
    %c0_23 = arith.constant 0 : index
    %33 = vector.load %arg6[%c0_22, %c0_23] : memref<4x128xbf16, #tpu.memory_space<vmem>>, vector<4x128xbf16>
    %cst_24 = arith.constant dense<0.000000e+00> : vector<8x128xf32>
    %34 = tpu.matmul %5, %33, %cst_24 {dimension_numbers = #tpu.dot_dimension_numbers<[1], [0], [0], [1], [0, 0, 1, 1], [], []>} : vector<8x4xbf16>, vector<4x128xbf16>, vector<8x128xf32> -> vector<8x128xf32>
    %35 = vector.extract_strided_slice %1 {offsets = [2, 0], sizes = [1, 128], strides = [1, 1]} : vector<3x128xf32> to vector<1x128xf32>
    %36 = vector.broadcast %35 : vector<1x128xf32> to vector<8x128xf32>
    %37 = arith.addf %34, %36 : vector<8x128xf32>
    %38 = arith.addf %32, %37 : vector<8x128xf32>
    %c0_25 = arith.constant 0 : index
    %c0_26 = arith.constant 0 : index
    %c0_27 = arith.constant 0 : index
    %39 = vector.load %arg8[%c0_25, %c0_26, %c0_27] : memref<1x8x128xf32, #tpu.memory_space<vmem>>, vector<1x8x128xf32>
    %40 = vector.shape_cast %39 : vector<1x8x128xf32> to vector<8x128xf32>
    %41 = vector.shape_cast %38 : vector<8x128xf32> to vector<1x8x128xf32>
    tpu.vector_store %arg8[%c0_25, %c0_26, %c0_27], %41 {strides = array<i32>} : memref<1x8x128xf32, #tpu.memory_space<vmem>>, vector<1x8x128xf32>,
    %42 = arith.extui %0 : i1 to i32
    %c0_i32_28 = arith.constant 0 : i32
    %43 = arith.cmpi ne, %42, %c0_i32_28 : i32
    scf.if %43 {
      %44 = vector.extract_strided_slice %37 {offsets = [0, 0], sizes = [4, 128], strides = [1, 1]} : vector<8x128xf32> to vector<4x128xf32>
      %c0_29 = arith.constant 0 : index
      %c0_30 = arith.constant 0 : index
      %c0_31 = arith.constant 0 : index
      %45 = vector.load %arg8[%c0_29, %c0_30, %c0_31] : memref<1x8x128xf32, #tpu.memory_space<vmem>>, vector<1x4x128xf32>
      %46 = vector.shape_cast %45 : vector<1x4x128xf32> to vector<4x128xf32>
      %47 = vector.shape_cast %44 : vector<4x128xf32> to vector<1x4x128xf32>
      tpu.vector_store %arg8[%c0_29, %c0_30, %c0_31], %47 {strides = array<i32>} : memref<1x8x128xf32, #tpu.memory_space<vmem>>, vector<1x4x128xf32>,
    } else {
    }
    return
  }
  func.func @transform_0(%arg0: i32, %arg1: i32) -> (i32, i32, i32, i32) {
    %c0_i32 = arith.constant 0 : i32
    %c0_i32_0 = arith.constant 0 : i32
    %c0_i32_1 = arith.constant 0 : i32
    return %arg0, %arg1, %c0_i32, %c0_i32_0 : i32, i32, i32, i32
  }
  func.func @transform_1(%arg0: i32, %arg1: i32) -> (i32, i32, i32) {
    %c0_i32 = arith.constant 0 : i32
    %c0_i32_0 = arith.constant 0 : i32
    return %arg0, %arg1, %c0_i32 : i32, i32, i32
  }
  func.func @transform_2(%arg0: i32, %arg1: i32) -> (i32, i32) {
    %c0_i32 = arith.constant 0 : i32
    %c0_i32_0 = arith.constant 0 : i32
    %c0_i32_1 = arith.constant 0 : i32
    return %c0_i32, %c0_i32_0 : i32, i32
  }
  func.func @transform_3(%arg0: i32, %arg1: i32) -> (i32, i32) {
    %c0_i32 = arith.constant 0 : i32
    %c0_i32_0 = arith.constant 0 : i32
    %c0_i32_1 = arith.constant 0 : i32
    return %c0_i32, %c0_i32_0 : i32, i32
  }
  func.func @transform_4(%arg0: i32, %arg1: i32) -> (i32, i32) {
    %c0_i32 = arith.constant 0 : i32
    %c0_i32_0 = arith.constant 0 : i32
    %c0_i32_1 = arith.constant 0 : i32
    return %c0_i32, %c0_i32_0 : i32, i32
  }
  func.func @transform_5(%arg0: i32, %arg1: i32) -> (i32, i32) {
    %c0_i32 = arith.constant 0 : i32
    %c0_i32_0 = arith.constant 0 : i32
    %c0_i32_1 = arith.constant 0 : i32
    return %c0_i32, %c0_i32_0 : i32, i32
  }
  func.func @transform_6(%arg0: i32, %arg1: i32) -> (i32, i32, i32) {
    %c0_i32 = arith.constant 0 : i32
    %c0_i32_0 = arith.constant 0 : i32
    return %arg0, %arg1, %c0_i32 : i32, i32, i32
  }
}

</mosaic_0001>

<llo_original>
// kernel: tpu_custom_call.1
$region0: #{tpu_custom_call.1}
  #allocation0 [shape = 'u32[]', space=smem, size = 0x4, offset = 0x4, fixed_abs, tag = 'smem constant byte address 0x4 - core index']
  #allocation1 [shape = 'u32[144,128]{1,0:T(1,128)}', space=vmem, size = 0x12000, scoped, tag = 'internal scratch']
  #allocation2 [shape = 'bf16[12,128]{1,0:T(8,128)(2,1)}', space=vmem, size = 0x1000, scoped, tag = 'scratch operand']
  %s0 = inlined_call_operand.vmem [shape: bf16[2,2,8,4], index: 0, kind: input, shape index: {}]
  %s1 = inlined_call_operand.vmem [shape: bf16[2,16,4], index: 1, kind: input, shape index: {}]
  %s2 = inlined_call_operand.vmem [shape: bf16[12,128], index: 2, kind: input, shape index: {}]
  %s3 = inlined_call_operand.hbm [shape: bf16[384,128], index: 3, kind: input, shape index: {}]
  %s4 = inlined_call_operand.vmem [shape: bf16[4,128], index: 4, kind: input, shape index: {}]
  %s5 = inlined_call_operand.vmem [shape: f32[3,128], index: 5, kind: input, shape index: {}]
  %s6 = inlined_call_operand.hbm [shape: f32[2,16,128], index: 6, kind: output, shape index: {}]
  %s7 = sld [smem:[#allocation0]]
  $region69: #{tpu_custom_call.1} parent=0
    _
  %s9 = ssub.s32 1, %s7
  %s10 = scalar_select 0, %s9, %s7
  $region1: #{tpu_custom_call.1} parent=0
    #allocation3 [shape = 'u8[98304]{0}', space=vmem, size = 0x18000, scoped, tag = 'input window, operand 3, single buffered']
    #allocation4 [shape = 's32[2]{0}', space=sflag, size = 0x8, scoped, tag = 'scoped memory for tpu_custom_call.1']
    #allocation5 [shape = 's32[2]{0}', space=sflag, size = 0x8, scoped, tag = 'scoped memory for tpu_custom_call.1']
    #allocation6 [shape = 'u8[8192]{0}', space=vmem, size = 0x2000, scoped, tag = 'output window, operand 0']
    %11 = vsyncpa [#allocation4], 0
    %12 = vsyncpa [#allocation5], 0
    %s13 = scalar_lea.sflag [#allocation5], 1
    %14 = vsyncpa %s13, 0
    loop: start=0, step=1, limit=6
    $region2: #{tpu_custom_call.1} parent=1 // loop_pre_header
      _
    $region3: #{tpu_custom_call.1} parent=1 // loop_header
      %s16 = sphi 0, %s20
      %p17 = scmp.ge.s32.totalorder %s16, 6
      %s23 = sphi 0, %s35
      %s24 = sphi 0, %s31
      %s25 = sphi 0, %s23
      %s26 = sphi 0, %s24
      %s27 = sphi 0, %s25
      %s28 = sphi 0, %s26
      %s40 = sphi 0, %s42
      %s43 = sphi 0, %s40
      %s44 = sphi 0, %s43
      %s60 = sphi 0, %s44
      %s68 = sphi 0, %s70
      %s71 = sphi 0, %s68
      %s72 = sphi 0, %s71
      %s88 = sphi 0, %s72
      %s92 = sphi 0, %s92
      %s94 = sphi 0, %s92
      %s95 = sphi 0, %s94
      %s109 = sphi 0, %s95
      %s113 = sphi 0, %s113
      %s115 = sphi 0, %s113
      %s116 = sphi 0, %s115
      %s130 = sphi 0, %s116
      %s134 = sphi 0, %s134
      %s136 = sphi 0, %s134
      %s137 = sphi 0, %s136
      %s151 = sphi 0, %s137
      %s155 = sphi 0, %s155
      %s157 = sphi 0, %s155
      %s158 = sphi 0, %s157
      %s172 = sphi 0, %s158
      %s180 = sphi 0, %s182
      %s183 = sphi 0, %s180
      %s184 = sphi 0, %s183
      %s200 = sphi 0, %s184
    $region4: #{tpu_custom_call.1} parent=1 // loop_header_branch
      %19 = sbr.rel (%p17) target = $region8
    $region5: #{tpu_custom_call.1} parent=1 // loop_body
      %s21 = ssub.s32 %s16, 1
      %s22 = ssub.s32 %s16, 2
      %s29 = sadd.s32 1, %s24
      %p30 = scmp.ge.s32.totalorder %s29, 2
      %s31 = scalar_select %p30, 0, %s29
      %s32 = sadd.s32 1, %s23
      %s33 = scalar_select %p30, %s32, %s23
      %p34 = scmp.ge.s32.totalorder %s33, 2
      %s35 = scalar_select %p34, 0, %s33
      %s36 = ssub.s32 %s23, %s35
      %s37 = ssub.s32 %s24, %s31
      %s38 = sor.u32 %s36, %s37
      %p39 = scmp.eq.s32.totalorder %s38, 0
      %s41 = sadd.s32 %s40, 1
      %s42 = scalar_select %p39, %s40, %s41
      %p45 = pneg %p39
      %p46 = scmp.eq.s32.totalorder %s16, 3
      %p47 = por %p45, %p46
      %p48 = scmp.ne.s32.totalorder %s40, %s43
      %p49 = scmp.eq.s32.totalorder %s16, 0
      %p50 = por %p48, %p49
      %p51 = scmp.ne.s32.totalorder %s40, %s43
      %p52 = scmp.eq.s32.totalorder %s21, 3
      %p53 = por %p51, %p52
      %p54 = scmp.ne.s32.totalorder %s43, %s44
      %p55 = scmp.eq.s32.totalorder %s21, 0
      %p56 = por %p54, %p55
      %p57 = scmp.ne.s32.totalorder %s43, %s44
      %p58 = scmp.eq.s32.totalorder %s22, 3
      %p59 = por %p57, %p58
      %p61 = scmp.ne.s32.totalorder %s44, %s60
      %p62 = scmp.eq.s32.totalorder %s22, 0
      %p63 = por %p61, %p62
      %s64 = ssub.s32 %s23, %s35
      %s65 = ssub.s32 %s24, %s31
      %s66 = sor.u32 %s64, %s65
      %p67 = scmp.eq.s32.totalorder %s66, 0
      %s69 = sadd.s32 %s68, 1
      %s70 = scalar_select %p67, %s68, %s69
      %p73 = pneg %p67
      %p74 = scmp.eq.s32.totalorder %s16, 3
      %p75 = por %p73, %p74
      %p76 = scmp.ne.s32.totalorder %s68, %s71
      %p77 = scmp.eq.s32.totalorder %s16, 0
      %p78 = por %p76, %p77
      %p79 = scmp.ne.s32.totalorder %s68, %s71
      %p80 = scmp.eq.s32.totalorder %s21, 3
      %p81 = por %p79, %p80
      %p82 = scmp.ne.s32.totalorder %s71, %s72
      %p83 = scmp.eq.s32.totalorder %s21, 0
      %p84 = por %p82, %p83
      %p85 = scmp.ne.s32.totalorder %s71, %s72
      %p86 = scmp.eq.s32.totalorder %s22, 3
      %p87 = por %p85, %p86
      %p89 = scmp.ne.s32.totalorder %s72, %s88
      %p90 = scmp.eq.s32.totalorder %s22, 0
      %p91 = por %p89, %p90
      %s93 = sadd.s32 %s92, 1
      %p96 = scmp.eq.s32.totalorder %s16, 3
      %p97 = scmp.ne.s32.totalorder %s92, %s94
      %p98 = scmp.eq.s32.totalorder %s16, 0
      %p99 = por %p97, %p98
      %p100 = scmp.ne.s32.totalorder %s92, %s94
      %p101 = scmp.eq.s32.totalorder %s21, 3
      %p102 = por %p100, %p101
      %p103 = scmp.ne.s32.totalorder %s94, %s95
      %p104 = scmp.eq.s32.totalorder %s21, 0
      %p105 = por %p103, %p104
      %p106 = scmp.ne.s32.totalorder %s94, %s95
      %p107 = scmp.eq.s32.totalorder %s22, 3
      %p108 = por %p106, %p107
      %p110 = scmp.ne.s32.totalorder %s95, %s109
      %p111 = scmp.eq.s32.totalorder %s22, 0
      %p112 = por %p110, %p111
      %s114 = sadd.s32 %s113, 1
      %p117 = scmp.eq.s32.totalorder %s16, 3
      %p118 = scmp.ne.s32.totalorder %s113, %s115
      %p119 = scmp.eq.s32.totalorder %s16, 0
      %p120 = por %p118, %p119
      %p121 = scmp.ne.s32.totalorder %s113, %s115
      %p122 = scmp.eq.s32.totalorder %s21, 3
      %p123 = por %p121, %p122
      %p124 = scmp.ne.s32.totalorder %s115, %s116
      %p125 = scmp.eq.s32.totalorder %s21, 0
      %p126 = por %p124, %p125
      %p127 = scmp.ne.s32.totalorder %s115, %s116
      %p128 = scmp.eq.s32.totalorder %s22, 3
      %p129 = por %p127, %p128
      %p131 = scmp.ne.s32.totalorder %s116, %s130
      %p132 = scmp.eq.s32.totalorder %s22, 0
      %p133 = por %p131, %p132
      %s135 = sadd.s32 %s134, 1
      %p138 = scmp.eq.s32.totalorder %s16, 3
      %p139 = scmp.ne.s32.totalorder %s134, %s136
      %p140 = scmp.eq.s32.totalorder %s16, 0
      %p141 = por %p139, %p140
      %p142 = scmp.ne.s32.totalorder %s134, %s136
      %p143 = scmp.eq.s32.totalorder %s21, 3
      %p144 = por %p142, %p143
      %p145 = scmp.ne.s32.totalorder %s136, %s137
      %p146 = scmp.eq.s32.totalorder %s21, 0
      %p147 = por %p145, %p146
      %p148 = scmp.ne.s32.totalorder %s136, %s137
      %p149 = scmp.eq.s32.totalorder %s22, 3
      %p150 = por %p148, %p149
      %p152 = scmp.ne.s32.totalorder %s137, %s151
      %p153 = scmp.eq.s32.totalorder %s22, 0
      %p154 = por %p152, %p153
      %s156 = sadd.s32 %s155, 1
      %p159 = scmp.eq.s32.totalorder %s16, 3
      %p160 = scmp.ne.s32.totalorder %s155, %s157
      %p161 = scmp.eq.s32.totalorder %s16, 0
      %p162 = por %p160, %p161
      %p163 = scmp.ne.s32.totalorder %s155, %s157
      %p164 = scmp.eq.s32.totalorder %s21, 3
      %p165 = por %p163, %p164
      %p166 = scmp.ne.s32.totalorder %s157, %s158
      %p167 = scmp.eq.s32.totalorder %s21, 0
      %p168 = por %p166, %p167
      %p169 = scmp.ne.s32.totalorder %s157, %s158
      %p170 = scmp.eq.s32.totalorder %s22, 3
      %p171 = por %p169, %p170
      %p173 = scmp.ne.s32.totalorder %s158, %s172
      %p174 = scmp.eq.s32.totalorder %s22, 0
      %p175 = por %p173, %p174
      %s176 = ssub.s32 %s23, %s35
      %s177 = ssub.s32 %s24, %s31
      %s178 = sor.u32 %s176, %s177
      %p179 = scmp.eq.s32.totalorder %s178, 0
      %s181 = sadd.s32 %s180, 1
      %s182 = scalar_select %p179, %s180, %s181
      %p185 = pneg %p179
      %p186 = scmp.eq.s32.totalorder %s16, 3
      %p187 = por %p185, %p186
      %p188 = scmp.ne.s32.totalorder %s180, %s183
      %p189 = scmp.eq.s32.totalorder %s16, 0
      %p190 = por %p188, %p189
      %p191 = scmp.ne.s32.totalorder %s180, %s183
      %p192 = scmp.eq.s32.totalorder %s21, 3
      %p193 = por %p191, %p192
      %p194 = scmp.ne.s32.totalorder %s183, %s184
      %p195 = scmp.eq.s32.totalorder %s21, 0
      %p196 = por %p194, %p195
      %p197 = scmp.ne.s32.totalorder %s183, %s184
      %p198 = scmp.eq.s32.totalorder %s22, 3
      %p199 = por %p197, %p198
      %p201 = scmp.ne.s32.totalorder %s184, %s200
      %p202 = scmp.eq.s32.totalorder %s22, 0
      %p203 = por %p201, %p202
      %p204 = scmp.le.s32.totalorder 1, %s16
      %p205 = scmp.lt.s32.totalorder %s16, 5
      %p206 = pnand %p204, %p205
      %p207 = pneg %p206
      // Predicated region
      $region9: #{tpu_custom_call.1} parent=5 // pred_check
        _
      $region10: #{tpu_custom_call.1} parent=5 // pred_check_branch
        %209 = sbr.rel (%p206) target = $region12
      $region11: #{tpu_custom_call.1} parent=5 // pred_region
        %s210 = ssub.s32 %s16, 1
        // Predicated region
        $region13: #{tpu_custom_call.1} parent=11 // pred_check
          %p211 = pneg %p105
        $region14: #{tpu_custom_call.1} parent=11 // pred_check_branch
          %213 = sbr.rel (%p211) target = $region16
        $region15: #{tpu_custom_call.1} parent=11 // pred_region
          _
        $region16: #{tpu_custom_call.1} parent=11 // pred_fallthru
          _
        // Predicated region
        $region17: #{tpu_custom_call.1} parent=11 // pred_check
          %p214 = pneg %p126
        $region18: #{tpu_custom_call.1} parent=11 // pred_check_branch
          %216 = sbr.rel (%p214) target = $region20
        $region19: #{tpu_custom_call.1} parent=11 // pred_region
          %s218 = ssub.s32 3072, 3072
          %219 = vsyncadd [#allocation4], %s218
          %s220 = sshll.u32 [#allocation3], 4
          %s221 = int_to_ptr.vmem [resolvable:$true] %s220
          %226 = dma.hbm_to_vmem [thread:$0]  %s3, 3072, %s221, [#allocation4], 64, 64, 4
        $region20: #{tpu_custom_call.1} parent=11 // pred_fallthru
          _
        // Predicated region
        $region21: #{tpu_custom_call.1} parent=11 // pred_check
          %p227 = pneg %p147
        $region22: #{tpu_custom_call.1} parent=11 // pred_check_branch
          %229 = sbr.rel (%p227) target = $region24
        $region23: #{tpu_custom_call.1} parent=11 // pred_region
          _
        $region24: #{tpu_custom_call.1} parent=11 // pred_fallthru
          _
        // Predicated region
        $region25: #{tpu_custom_call.1} parent=11 // pred_check
          %p230 = pneg %p168
        $region26: #{tpu_custom_call.1} parent=11 // pred_check_branch
          %232 = sbr.rel (%p230) target = $region28
        $region27: #{tpu_custom_call.1} parent=11 // pred_region
          _
        $region28: #{tpu_custom_call.1} parent=11 // pred_fallthru
          _
      $region12: #{tpu_custom_call.1} parent=5 // pred_fallthru
        _
      %p233 = scmp.lt.s32.totalorder %s16, 4
      // Predicated region
      $region29: #{tpu_custom_call.1} parent=5 // pred_check
        %p234 = pneg %p233
      $region30: #{tpu_custom_call.1} parent=5 // pred_check_branch
        %236 = sbr.rel (%p234) target = $region32
      $region31: #{tpu_custom_call.1} parent=5 // pred_region
        // Predicated region
        $region33: #{tpu_custom_call.1} parent=31 // pred_check
          %p237 = pneg %p50
        $region34: #{tpu_custom_call.1} parent=31 // pred_check_branch
          %239 = sbr.rel (%p237) target = $region36
        $region35: #{tpu_custom_call.1} parent=31 // pred_region
          %p240 = scmp.lt.s32.totalorder %s23, 1
          %s241 = scalar_select %p240, %s23, 1
          %p242 = scmp.lt.s32.totalorder %s24, 1
          %s243 = scalar_select %p242, %s24, 1
          %s244 = smul.addr %s241, 2
          %s245 = sadd.s32 %s243, %s244
          %s246 = smul.addr %s245, 4
          %s247 = scalar_lea.vmem %s0, %s246
        $region36: #{tpu_custom_call.1} parent=31 // pred_fallthru
          _
        // Predicated region
        $region37: #{tpu_custom_call.1} parent=31 // pred_check
          %p248 = pneg %p78
        $region38: #{tpu_custom_call.1} parent=31 // pred_check_branch
          %250 = sbr.rel (%p248) target = $region40
        $region39: #{tpu_custom_call.1} parent=31 // pred_region
          %p251 = scmp.lt.s32.totalorder %s23, 1
          %s252 = scalar_select %p251, %s23, 1
          %p253 = scmp.lt.s32.totalorder %s24, 1
          %s254 = scalar_select %p253, %s24, 1
          %s255 = smul.addr %s252, 2
          %s256 = sadd.s32 %s254, %s255
          %s257 = smul.addr %s256, 4
          %s258 = scalar_lea.vmem %s1, %s257
        $region40: #{tpu_custom_call.1} parent=31 // pred_fallthru
          _
      $region32: #{tpu_custom_call.1} parent=5 // pred_fallthru
        _
      %p259 = scmp.le.s32.totalorder 1, %s16
      %p260 = scmp.lt.s32.totalorder %s16, 5
      %p261 = pnand %p259, %p260
      %p262 = pneg %p261
      // Predicated region
      $region41: #{tpu_custom_call.1} parent=5 // pred_check
        _
      $region42: #{tpu_custom_call.1} parent=5 // pred_check_branch
        %264 = sbr.rel (%p261) target = $region44
      $region43: #{tpu_custom_call.1} parent=5 // pred_region
        %s265 = ssub.s32 %s16, 1
        // Predicated region
        $region45: #{tpu_custom_call.1} parent=43 // pred_check
          %p266 = pneg %p126
        $region46: #{tpu_custom_call.1} parent=43 // pred_check_branch
          %268 = sbr.rel (%p266) target = $region48
        $region47: #{tpu_custom_call.1} parent=43 // pred_region
          %269 = dma.done [#allocation4], 3072
        $region48: #{tpu_custom_call.1} parent=43 // pred_fallthru
          _
        %p270 = scmp.lt.s32.totalorder %s25, 1
        %s271 = scalar_select %p270, %s25, 1
        %p272 = scmp.lt.s32.totalorder %s26, 1
        %s273 = scalar_select %p272, %s26, 1
        %s274 = smul.addr %s271, 2
        %s275 = sadd.s32 %s273, %s274
        %s276 = smul.addr %s275, 4
        %s277 = scalar_lea.vmem %s0, %s276
        %p278 = pneg %p56
        %p279 = pneg %p53
        %p280 = scmp.lt.s32.totalorder %s25, 1
        %s281 = scalar_select %p280, %s25, 1
        %p282 = scmp.lt.s32.totalorder %s26, 1
        %s283 = scalar_select %p282, %s26, 1
        %s284 = smul.addr %s281, 2
        %s285 = sadd.s32 %s283, %s284
        %s286 = smul.addr %s285, 4
        %s287 = scalar_lea.vmem %s1, %s286
        %p288 = pneg %p84
        %p289 = pneg %p81
        %p290 = pneg %p105
        %p291 = pneg %p102
        %p292 = pneg %p126
        %p293 = pneg %p123
        %p294 = pneg %p147
        %p295 = pneg %p144
        %p296 = pneg %p168
        %p297 = pneg %p165
        %p298 = pneg %p196
        %p299 = pneg %p193
        %s300 = sand.u32 %s183, 1
        %s301 = scalar_lea.sflag [#allocation5], %s300
        %s302 = sand.u32 %s183, 1
        %s303 = smul.addr %s302, 8
        %s304 = scalar_lea.vmem [#allocation6], %s303
        %p305 = scmp.lt.s32.totalorder %s25, 1
        %s306 = scalar_select %p305, %s25, 1
        %p307 = scmp.lt.s32.totalorder %s26, 1
        %s308 = scalar_select %p307, %s26, 1
        %s309 = smul.addr %s306, 2
        %s310 = sadd.s32 %s308, %s309
        %s311 = smul.addr %s310, 4
        %s312 = scalar_lea.vmem %s0, %s311
        %p313 = scmp.lt.s32.totalorder %s25, 1
        %s314 = scalar_select %p313, %s25, 1
        %p315 = scmp.lt.s32.totalorder %s26, 1
        %s316 = scalar_select %p315, %s26, 1
        %s317 = smul.addr %s314, 2
        %s318 = sadd.s32 %s316, %s317
        %s319 = smul.addr %s318, 4
        %s320 = scalar_lea.vmem %s1, %s319
        %p322 = scmp.eq.s32.totalorder %s26, 0
        %v323 = vld [vmem:[%s5] sm:$0x7]
        %v324 = vld [vmem:[%s312] sm:$0xf]
        %v325 = vld [vmem:[%s320] sm:$0xf]
        %v327 = vunpack.c.l.b16 %v325
        %v328 = vpack.c.b16 %v327, %v327
        %vm329 = vcmask 1043456
        %v332 = vsel %vm329, %v324, %v328
        %v334 = vrot.slane %v332, 1
        %335 = vrot.lane.b32.xlu0 %v334, 4
        %v336 = vpop.permute.xlu0 %335
        %v337 = vrot.slane %v332, 2
        %338 = vrot.lane.b32.xlu0 %v337, 8
        %v339 = vpop.permute.xlu0 %338
        %vm340 = vcmask 31744
        %v342 = vsel %vm340, %v332, %v336
        %vm343 = vcmask 64512
        %v345 = vsel %vm343, %v342, %v339
        %v346 = vld [vmem:[%s2] sm:$0xf]
        %v347 = vld [vmem:[%s2 + $0x4] sm:$0x3]
        %v348 = vlaneseq
        %v349 = vshrl.u32 %v348, 7
        %v350 = vsub.s32 0, %v349
        %v351 = vrot.slane %v323, %v350
        %v354 = vunpack.c.l.b16 %v346
        %v355 = vunpack.c.l.b16 %v347
        %v356 = vpack.c.b16 %v355, %v354
        %vm357 = vcmask 97280
        %v358 = vsel %vm357, %v345, 0
        %vm360 = vcmask 1045504
        %v362 = vsel %vm360, %v356, 0
        %364 = vmatprep.subr.bf16.mxu0 0
        %365 = vmatpush1.bf16.msra.mxu0 %v362
        %366 = vmatprep.subr.bf16.mxu0 0
        %367 = vmatpush1.bf16.msra.mxu0 0
        %368 = vmatprep.subr.bf16.mxu0 0
        %369 = vmatpush1.bf16.msra.mxu0 0
        %370 = vmatprep.subr.bf16.mxu0 0
        %371 = vmatpush1.bf16.msra.mxu0 0
        %372 = vmatprep.subr.bf16.mxu0 0
        %373 = vmatpush1.bf16.msra.mxu0 0
        %374 = vmatprep.subr.bf16.mxu0 0
        %375 = vmatpush1.bf16.msra.mxu0 0
        %376 = vmatprep.subr.bf16.mxu0 0
        %377 = vmatpush1.bf16.msra.mxu0 0
        %378 = vmatprep.subr.bf16.mxu0 0
        %379 = vmatpush1.bf16.msra.mxu0 0
        %380 = vmatprep.subr.bf16.mxu0 0
        %381 = vmatpush1.bf16.msra.mxu0 0
        %382 = vmatprep.subr.bf16.mxu0 0
        %383 = vmatpush1.bf16.msra.mxu0 0
        %384 = vmatprep.subr.bf16.mxu0 0
        %385 = vmatpush1.bf16.msra.mxu0 0
        %386 = vmatprep.subr.bf16.mxu0 0
        %387 = vmatpush1.bf16.msra.mxu0 0
        %388 = vmatprep.subr.bf16.mxu0 0
        %389 = vmatpush1.bf16.msra.mxu0 0
        %390 = vmatprep.subr.bf16.mxu0 0
        %391 = vmatpush1.bf16.msra.mxu0 0
        %392 = vmatprep.subr.bf16.mxu0 0
        %393 = vmatpush1.bf16.msra.mxu0 0
        %394 = vmatprep.subr.bf16.mxu0 0
        %395 = vmatpush1.bf16.msra.mxu0 0
        %396 = vmatprep.mubr.bf16.mxu0 0
        %397 = vmatmul.mubr.bf16.gmra.mrb[0].mxu0 %v358
        %v398 = vpop.f32.mrb[0].mxu0
        %v399 = vadd.f32 %v351, %v398
        %v400 = vpop.f32.mrb[0].mxu0
        %v401 = vpop.f32.mrb[0].mxu0
        %v402 = vadd.f32 %v351, %v401
        %v403 = vpop.f32.mrb[0].mxu0
        %404 = vdwg.mxu0
        %v405 = vmax.f32 %v399, 0.0
        %v406 = vmax.f32 %v402, 0.0
        %v407 = vpack.c.bf16 %v406, %v405
        %v409 = vunpack.c.l.b16 %v407
        %v410 = vunpack.c.h.b16 %v407
        %v411 = vpack.c.b16 %v409, %v409
        %v412 = vpack.c.b16 %v410, %v410
        %415 = vst [vmem:[#allocation2] sm:$0xf] %v411
        %416 = vst [vmem:[#allocation2 + $0x4] sm:$0x3] %v412
        // Predicated region
        $region49: #{tpu_custom_call.1} parent=43 // pred_check
          %p417 = pneg %p322
        $region50: #{tpu_custom_call.1} parent=43 // pred_check_branch
          %419 = sbr.rel (%p417) target = $region52
        $region51: #{tpu_custom_call.1} parent=43 // pred_region
          %420 = vst [vmem:[#allocation2] sm:$0xf] 0
        $region52: #{tpu_custom_call.1} parent=43 // pred_fallthru
          _
        %v421 = vld [vmem:[#allocation2] sm:$0xf]
        %v422 = vld [vmem:[#allocation2] sm:$0xe]
        %v423 = vld [vmem:[#allocation2 + $0x4] sm:$0x1]
        %v424 = vld [vmem:[#allocation2] sm:$0xc]
        %v425 = vld [vmem:[#allocation2 + $0x4] sm:$0x3]
        %v428 = vunpack.c.l.b16 %v422
        %v429 = vunpack.c.l.b16 %v423
        %v430 = vpack.c.b16 %v429, %v428
        %v431 = vrot.slane %v430, 1
        %v435 = vunpack.c.l.b16 %v424
        %v436 = vunpack.c.l.b16 %v425
        %v437 = vpack.c.b16 %v436, %v435
        %v438 = vrot.slane %v437, 2
        %v440 = vld [vmem:[#allocation3] sm:$0xf]
        %v441 = vld [vmem:[#allocation3 + $0x4] sm:$0xf]
        %v442 = vld [vmem:[#allocation3 + $0x8] sm:$0xf]
        %v443 = vld [vmem:[#allocation3 + $0xc] sm:$0xf]
        %v444 = vld [vmem:[#allocation3 + $0x10] sm:$0xf]
        %v445 = vld [vmem:[#allocation3 + $0x14] sm:$0xf]
        %v446 = vld [vmem:[#allocation3 + $0x18] sm:$0xf]
        %v447 = vld [vmem:[#allocation3 + $0x1c] sm:$0xf]
        %v448 = vld [vmem:[#allocation3 + $0x20] sm:$0xf]
        %v449 = vld [vmem:[#allocation3 + $0x24] sm:$0xf]
        %v450 = vld [vmem:[#allocation3 + $0x28] sm:$0xf]
        %v451 = vld [vmem:[#allocation3 + $0x2c] sm:$0xf]
        %v452 = vld [vmem:[#allocation3 + $0x30] sm:$0xf]
        %v453 = vld [vmem:[#allocation3 + $0x34] sm:$0xf]
        %v454 = vld [vmem:[#allocation3 + $0x38] sm:$0xf]
        %v455 = vld [vmem:[#allocation3 + $0x3c] sm:$0xf]
        %v456 = vld [vmem:[#allocation3 + $0x40] sm:$0xf]
        %v457 = vld [vmem:[#allocation3 + $0x44] sm:$0xf]
        %v458 = vld [vmem:[#allocation3 + $0x48] sm:$0xf]
        %v459 = vld [vmem:[#allocation3 + $0x4c] sm:$0xf]
        %v460 = vld [vmem:[#allocation3 + $0x50] sm:$0xf]
        %v461 = vld [vmem:[#allocation3 + $0x54] sm:$0xf]
        %v462 = vld [vmem:[#allocation3 + $0x58] sm:$0xf]
        %v463 = vld [vmem:[#allocation3 + $0x5c] sm:$0xf]
        %v464 = vld [vmem:[#allocation3 + $0x60] sm:$0xf]
        %v465 = vld [vmem:[#allocation3 + $0x64] sm:$0xf]
        %v466 = vld [vmem:[#allocation3 + $0x68] sm:$0xf]
        %v467 = vld [vmem:[#allocation3 + $0x6c] sm:$0xf]
        %v468 = vld [vmem:[#allocation3 + $0x70] sm:$0xf]
        %v469 = vld [vmem:[#allocation3 + $0x74] sm:$0xf]
        %v470 = vld [vmem:[#allocation3 + $0x78] sm:$0xf]
        %v471 = vld [vmem:[#allocation3 + $0x7c] sm:$0xf]
        %v472 = vld [vmem:[#allocation3 + $0x80] sm:$0xf]
        %v473 = vld [vmem:[#allocation3 + $0x84] sm:$0xf]
        %v474 = vld [vmem:[#allocation3 + $0x88] sm:$0xf]
        %v475 = vld [vmem:[#allocation3 + $0x8c] sm:$0xf]
        %v476 = vld [vmem:[#allocation3 + $0x90] sm:$0xf]
        %v477 = vld [vmem:[#allocation3 + $0x94] sm:$0xf]
        %v478 = vld [vmem:[#allocation3 + $0x98] sm:$0xf]
        %v479 = vld [vmem:[#allocation3 + $0x9c] sm:$0xf]
        %v480 = vld [vmem:[#allocation3 + $0xa0] sm:$0xf]
        %v481 = vld [vmem:[#allocation3 + $0xa4] sm:$0xf]
        %v482 = vld [vmem:[#allocation3 + $0xa8] sm:$0xf]
        %v483 = vld [vmem:[#allocation3 + $0xac] sm:$0xf]
        %v484 = vld [vmem:[#allocation3 + $0xb0] sm:$0xf]
        %v485 = vld [vmem:[#allocation3 + $0xb4] sm:$0xf]
        %v486 = vld [vmem:[#allocation3 + $0xb8] sm:$0xf]
        %v487 = vld [vmem:[#allocation3 + $0xbc] sm:$0xf]
        %v488 = vlaneseq
        %v489 = vshrl.u32 %v488, 7
        %v490 = vsub.s32 1, %v489
        %v491 = vrot.slane %v323, %v490
        %v540 = vunpack.c.l.b16 %v440
        %v541 = vunpack.c.l.b16 %v441
        %v542 = vunpack.c.l.b16 %v442
        %v543 = vunpack.c.l.b16 %v443
        %v544 = vunpack.c.l.b16 %v444
        %v545 = vunpack.c.l.b16 %v445
        %v546 = vunpack.c.l.b16 %v446
        %v547 = vunpack.c.l.b16 %v447
        %v548 = vunpack.c.l.b16 %v448
        %v549 = vunpack.c.l.b16 %v449
        %v550 = vunpack.c.l.b16 %v450
        %v551 = vunpack.c.l.b16 %v451
        %v552 = vunpack.c.l.b16 %v452
        %v553 = vunpack.c.l.b16 %v453
        %v554 = vunpack.c.l.b16 %v454
        %v555 = vunpack.c.l.b16 %v455
        %v556 = vunpack.c.l.b16 %v456
        %v557 = vunpack.c.l.b16 %v457
        %v558 = vunpack.c.l.b16 %v458
        %v559 = vunpack.c.l.b16 %v459
        %v560 = vunpack.c.l.b16 %v460
        %v561 = vunpack.c.l.b16 %v461
        %v562 = vunpack.c.l.b16 %v462
        %v563 = vunpack.c.l.b16 %v463
        %v564 = vunpack.c.l.b16 %v464
        %v565 = vunpack.c.l.b16 %v465
        %v566 = vunpack.c.l.b16 %v466
        %v567 = vunpack.c.l.b16 %v467
        %v568 = vunpack.c.l.b16 %v468
        %v569 = vunpack.c.l.b16 %v469
        %v570 = vunpack.c.l.b16 %v470
        %v571 = vunpack.c.l.b16 %v471
        %v572 = vunpack.c.l.b16 %v472
        %v573 = vunpack.c.l.b16 %v473
        %v574 = vunpack.c.l.b16 %v474
        %v575 = vunpack.c.l.b16 %v475
        %v576 = vunpack.c.l.b16 %v476
        %v577 = vunpack.c.l.b16 %v477
        %v578 = vunpack.c.l.b16 %v478
        %v579 = vunpack.c.l.b16 %v479
        %v580 = vunpack.c.l.b16 %v480
        %v581 = vunpack.c.l.b16 %v481
        %v582 = vunpack.c.l.b16 %v482
        %v583 = vunpack.c.l.b16 %v483
        %v584 = vunpack.c.l.b16 %v484
        %v585 = vunpack.c.l.b16 %v485
        %v586 = vunpack.c.l.b16 %v486
        %v587 = vunpack.c.l.b16 %v487
        %v588 = vpack.c.b16 %v541, %v540
        %v589 = vpack.c.b16 %v543, %v542
        %v590 = vpack.c.b16 %v545, %v544
        %v591 = vpack.c.b16 %v547, %v546
        %v592 = vpack.c.b16 %v549, %v548
        %v593 = vpack.c.b16 %v551, %v550
        %v594 = vpack.c.b16 %v553, %v552
        %v595 = vpack.c.b16 %v555, %v554
        %v596 = vpack.c.b16 %v557, %v556
        %v597 = vpack.c.b16 %v559, %v558
        %v598 = vpack.c.b16 %v561, %v560
        %v599 = vpack.c.b16 %v563, %v562
        %v600 = vpack.c.b16 %v565, %v564
        %v601 = vpack.c.b16 %v567, %v566
        %v602 = vpack.c.b16 %v569, %v568
        %v603 = vpack.c.b16 %v571, %v570
        %v604 = vpack.c.b16 %v573, %v572
        %v605 = vpack.c.b16 %v575, %v574
        %v606 = vpack.c.b16 %v577, %v576
        %v607 = vpack.c.b16 %v579, %v578
        %v608 = vpack.c.b16 %v581, %v580
        %v609 = vpack.c.b16 %v583, %v582
        %v610 = vpack.c.b16 %v585, %v584
        %v611 = vpack.c.b16 %v587, %v586
        %636 = vmatprep.subr.bf16.mxu0 0
        %637 = vmatpush1.bf16.msra.mxu0 %v588
        %638 = vmatprep.subr.bf16.mxu0 0
        %639 = vmatpush1.bf16.msra.mxu0 %v589
        %640 = vmatprep.subr.bf16.mxu0 0
        %641 = vmatpush1.bf16.msra.mxu0 %v590
        %642 = vmatprep.subr.bf16.mxu0 0
        %643 = vmatpush1.bf16.msra.mxu0 %v591
        %644 = vmatprep.subr.bf16.mxu0 0
        %645 = vmatpush1.bf16.msra.mxu0 %v592
        %646 = vmatprep.subr.bf16.mxu0 0
        %647 = vmatpush1.bf16.msra.mxu0 %v593
        %648 = vmatprep.subr.bf16.mxu0 0
        %649 = vmatpush1.bf16.msra.mxu0 %v594
        %650 = vmatprep.subr.bf16.mxu0 0
        %651 = vmatpush1.bf16.msra.mxu0 %v595
        %652 = vmatprep.subr.bf16.mxu0 0
        %653 = vmatpush1.bf16.msra.mxu0 %v596
        %654 = vmatprep.subr.bf16.mxu0 0
        %655 = vmatpush1.bf16.msra.mxu0 %v597
        %656 = vmatprep.subr.bf16.mxu0 0
        %657 = vmatpush1.bf16.msra.mxu0 %v598
        %658 = vmatprep.subr.bf16.mxu0 0
        %659 = vmatpush1.bf16.msra.mxu0 %v599
        %660 = vmatprep.subr.bf16.mxu0 0
        %661 = vmatpush1.bf16.msra.mxu0 %v600
        %662 = vmatprep.subr.bf16.mxu0 0
        %663 = vmatpush1.bf16.msra.mxu0 %v601
        %664 = vmatprep.subr.bf16.mxu0 0
        %665 = vmatpush1.bf16.msra.mxu0 %v602
        %666 = vmatprep.subr.bf16.mxu0 0
        %667 = vmatpush1.bf16.msra.mxu0 %v603
        %668 = vmatprep.mubr.bf16.mxu0 %v431
        %669 = vmatmul.mubr.bf16.gmra.mrb[0].mxu0 %v421
        %v670 = vpop.f32.mrb[0].mxu0
        %v671 = vadd.f32 %v491, %v670
        %v672 = vpop.f32.mrb[0].mxu0
        %v673 = vpop.f32.mrb[0].mxu0
        %v674 = vpop.f32.mrb[0].mxu0
        %675 = vdwg.mxu0
        %676 = vmatprep.subr.bf16.mxu0 0
        %677 = vmatpush1.bf16.msra.mxu0 %v604
        %678 = vmatprep.subr.bf16.mxu0 0
        %679 = vmatpush1.bf16.msra.mxu0 %v605
        %680 = vmatprep.subr.bf16.mxu0 0
        %681 = vmatpush1.bf16.msra.mxu0 %v606
        %682 = vmatprep.subr.bf16.mxu0 0
        %683 = vmatpush1.bf16.msra.mxu0 %v607
        %684 = vmatprep.subr.bf16.mxu0 0
        %685 = vmatpush1.bf16.msra.mxu0 %v608
        %686 = vmatprep.subr.bf16.mxu0 0
        %687 = vmatpush1.bf16.msra.mxu0 %v609
        %688 = vmatprep.subr.bf16.mxu0 0
        %689 = vmatpush1.bf16.msra.mxu0 %v610
        %690 = vmatprep.subr.bf16.mxu0 0
        %691 = vmatpush1.bf16.msra.mxu0 %v611
        %692 = vmatprep.subr.bf16.mxu0 0
        %693 = vmatpush1.bf16.msra.mxu0 0
        %694 = vmatprep.subr.bf16.mxu0 0
        %695 = vmatpush1.bf16.msra.mxu0 0
        %696 = vmatprep.subr.bf16.mxu0 0
        %697 = vmatpush1.bf16.msra.mxu0 0
        %698 = vmatprep.subr.bf16.mxu0 0
        %699 = vmatpush1.bf16.msra.mxu0 0
        %700 = vmatprep.subr.bf16.mxu0 0
        %701 = vmatpush1.bf16.msra.mxu0 0
        %702 = vmatprep.subr.bf16.mxu0 0
        %703 = vmatpush1.bf16.msra.mxu0 0
        %704 = vmatprep.subr.bf16.mxu0 0
        %705 = vmatpush1.bf16.msra.mxu0 0
        %706 = vmatprep.subr.bf16.mxu0 0
        %707 = vmatpush1.bf16.msra.mxu0 0
        %708 = vmatprep.mubr.bf16.mxu0 0
        %709 = vmatmul.mubr.bf16.gmra.mrb[0].mxu0 %v438
        %v710 = vpop.f32.mrb[0].mxu0
        %v711 = vadd.f32 %v671, %v710
        %v712 = vpop.f32.mrb[0].mxu0
        %v713 = vpop.f32.mrb[0].mxu0
        %v714 = vpop.f32.mrb[0].mxu0
        %715 = vdwg.mxu0
        %v716 = vmax.f32 %v711, 0.0
        %v717 = vld [vmem:[%s4] sm:$0x3]
        %v718 = vlaneseq
        %v719 = vshrl.u32 %v718, 7
        %v720 = vsub.s32 2, %v719
        %v721 = vrot.slane %v323, %v720
        %v723 = vsel %vm340, %v325, 0
        %vm725 = vcmask 1041408
        %v727 = vsel %vm725, %v717, 0
        %729 = vmatprep.subr.bf16.mxu0 0
        %730 = vmatpush1.bf16.msra.mxu0 %v727
        %731 = vmatprep.subr.bf16.mxu0 0
        %732 = vmatpush1.bf16.msra.mxu0 0
        %733 = vmatprep.subr.bf16.mxu0 0
        %734 = vmatpush1.bf16.msra.mxu0 0
        %735 = vmatprep.subr.bf16.mxu0 0
        %736 = vmatpush1.bf16.msra.mxu0 0
        %737 = vmatprep.subr.bf16.mxu0 0
        %738 = vmatpush1.bf16.msra.mxu0 0
        %739 = vmatprep.subr.bf16.mxu0 0
        %740 = vmatpush1.bf16.msra.mxu0 0
        %741 = vmatprep.subr.bf16.mxu0 0
        %742 = vmatpush1.bf16.msra.mxu0 0
        %743 = vmatprep.subr.bf16.mxu0 0
        %744 = vmatpush1.bf16.msra.mxu0 0
        %745 = vmatprep.subr.bf16.mxu0 0
        %746 = vmatpush1.bf16.msra.mxu0 0
        %747 = vmatprep.subr.bf16.mxu0 0
        %748 = vmatpush1.bf16.msra.mxu0 0
        %749 = vmatprep.subr.bf16.mxu0 0
        %750 = vmatpush1.bf16.msra.mxu0 0
        %751 = vmatprep.subr.bf16.mxu0 0
        %752 = vmatpush1.bf16.msra.mxu0 0
        %753 = vmatprep.subr.bf16.mxu0 0
        %754 = vmatpush1.bf16.msra.mxu0 0
        %755 = vmatprep.subr.bf16.mxu0 0
        %756 = vmatpush1.bf16.msra.mxu0 0
        %757 = vmatprep.subr.bf16.mxu0 0
        %758 = vmatpush1.bf16.msra.mxu0 0
        %759 = vmatprep.subr.bf16.mxu0 0
        %760 = vmatpush1.bf16.msra.mxu0 0
        %761 = vmatprep.mubr.bf16.mxu0 0
        %762 = vmatmul.mubr.bf16.gmra.mrb[0].mxu0 %v723
        %v763 = vpop.f32.mrb[0].mxu0
        %v764 = vadd.f32 %v721, %v763
        %v765 = vpop.f32.mrb[0].mxu0
        %v766 = vpop.f32.mrb[0].mxu0
        %v767 = vpop.f32.mrb[0].mxu0
        %768 = vdwg.mxu0
        %v769 = vadd.f32 %v716, %v764
        %770 = vst [vmem:[%s304] sm:$0xff] %v769
        // Predicated region
        $region53: #{tpu_custom_call.1} parent=43 // pred_check
          %p771 = pneg %p322
        $region54: #{tpu_custom_call.1} parent=43 // pred_check_branch
          %773 = sbr.rel (%p771) target = $region56
        $region55: #{tpu_custom_call.1} parent=43 // pred_region
          %774 = vst [vmem:[%s304] sm:$0xf] %v764
        $region56: #{tpu_custom_call.1} parent=43 // pred_fallthru
          _
        %s775 = sand.u32 %s183, 1
        %s776 = scalar_lea.sflag [#allocation5], %s775
        %s777 = sand.u32 %s183, 1
        %s778 = smul.addr %s777, 8
        %s779 = scalar_lea.vmem [#allocation6], %s778
        // Predicated region
        $region57: #{tpu_custom_call.1} parent=43 // pred_check
          %p780 = pneg %p193
        $region58: #{tpu_custom_call.1} parent=43 // pred_check_branch
          %782 = sbr.rel (%p780) target = $region60
        $region59: #{tpu_custom_call.1} parent=43 // pred_region
          %s784 = ssub.s32 128, 128
          %785 = vsyncadd %s776, %s784
          %s786 = smul.addr %s25, 2
          %s787 = sadd.s32 %s26, %s786
          %s788 = smul.addr %s787, 128
          %s789 = scalar_lea.hbm %s6, %s788
          %s791 = sshll.u32 %s779, 4
          %s792 = int_to_ptr.vmem [resolvable:$true] %s791
          %794 = dma.vmem_to_hbm [thread:$0]  %s792, 128, %s789, %s776
        $region60: #{tpu_custom_call.1} parent=43 // pred_fallthru
          _
      $region44: #{tpu_custom_call.1} parent=5 // pred_fallthru
        _
      %p795 = scmp.le.s32.totalorder 2, %s16
      // Predicated region
      $region61: #{tpu_custom_call.1} parent=5 // pred_check
        %p796 = pneg %p795
      $region62: #{tpu_custom_call.1} parent=5 // pred_check_branch
        %798 = sbr.rel (%p796) target = $region64
      $region63: #{tpu_custom_call.1} parent=5 // pred_region
        %s799 = ssub.s32 %s16, 2
        // Predicated region
        $region65: #{tpu_custom_call.1} parent=63 // pred_check
          %p800 = pneg %p199
        $region66: #{tpu_custom_call.1} parent=63 // pred_check_branch
          %802 = sbr.rel (%p800) target = $region68
        $region67: #{tpu_custom_call.1} parent=63 // pred_region
          %s803 = sand.u32 %s184, 1
          %s804 = scalar_lea.sflag [#allocation5], %s803
          %s805 = sand.u32 %s184, 1
          %s806 = smul.addr %s805, 8
          %s807 = scalar_lea.vmem [#allocation6], %s806
          %808 = dma.done %s804, 128
        $region68: #{tpu_custom_call.1} parent=63 // pred_fallthru
          _
      $region64: #{tpu_custom_call.1} parent=5 // pred_fallthru
        _
    $region6: #{tpu_custom_call.1} parent=1 // loop_footer
      %s20 = sadd.s32 1, %s16
    $region7: #{tpu_custom_call.1} parent=1 // loop_footer_branch
      %15 = sbr.rel target = $region3
    $region8: #{tpu_custom_call.1} parent=1 // loop_exit
      _
    %809 = vsyncpa [#allocation4], 1
    %s810 = scalar_lea.sflag [#allocation4], 1
    %811 = vsyncpa %s810, 1
    %812 = vsyncpa [#allocation5], 1
    %s813 = scalar_lea.sflag [#allocation5], 1
    %814 = vsyncpa %s813, 1

// kernel: tpu_custom_call.1
$region0: #{tpu_custom_call.1}
  #allocation0 [shape = 'u32[]', space=smem, size = 0x4, offset = 0x4, fixed_abs, tag = 'smem constant byte address 0x4 - core index']
  #allocation1 [shape = 'u32[144,128]{1,0:T(1,128)}', space=vmem, size = 0x12000, scoped, tag = 'internal scratch']
  #allocation2 [shape = 'bf16[12,128]{1,0:T(8,128)(2,1)}', space=vmem, size = 0x1000, scoped, tag = 'scratch operand']
  %s0 = inlined_call_operand.vmem [shape: bf16[2,2,8,4], index: 0, kind: input, shape index: {}]
  %s1 = inlined_call_operand.vmem [shape: bf16[2,16,4], index: 1, kind: input, shape index: {}]
  %s2 = inlined_call_operand.vmem [shape: bf16[12,128], index: 2, kind: input, shape index: {}]
  %s3 = inlined_call_operand.hbm [shape: bf16[384,128], index: 3, kind: input, shape index: {}]
  %s4 = inlined_call_operand.vmem [shape: bf16[4,128], index: 4, kind: input, shape index: {}]
  %s5 = inlined_call_operand.vmem [shape: f32[3,128], index: 5, kind: input, shape index: {}]
  %s6 = inlined_call_operand.hbm [shape: f32[2,16,128], index: 6, kind: output, shape index: {}]
  %s7 = sld [smem:[#allocation0]]
  $region69: #{tpu_custom_call.1} parent=0
    _
  %s9 = ssub.s32 1, %s7
  %s10 = scalar_select 0, %s9, %s7
  $region1: #{tpu_custom_call.1} parent=0
    #allocation3 [shape = 'u8[98304]{0}', space=vmem, size = 0x18000, scoped, tag = 'input window, operand 3, single buffered']
    #allocation4 [shape = 's32[2]{0}', space=sflag, size = 0x8, scoped, tag = 'scoped memory for tpu_custom_call.1']
    #allocation5 [shape = 's32[2]{0}', space=sflag, size = 0x8, scoped, tag = 'scoped memory for tpu_custom_call.1']
    #allocation6 [shape = 'u8[8192]{0}', space=vmem, size = 0x2000, scoped, tag = 'output window, operand 0']
    %11 = vsyncpa [#allocation4], 0
    %12 = vsyncpa [#allocation5], 0
    %s13 = scalar_lea.sflag [#allocation5], 1
    %14 = vsyncpa %s13, 0
    loop: start=0, step=1, limit=6
    $region2: #{tpu_custom_call.1} parent=1 // loop_pre_header
      _
    $region3: #{tpu_custom_call.1} parent=1 // loop_header
      %s16 = sphi 0, %s20
      %p17 = scmp.ge.s32.totalorder %s16, 6
      %s23 = sphi 0, %s35
      %s24 = sphi 0, %s31
      %s25 = sphi 0, %s23
      %s26 = sphi 0, %s24
      %s27 = sphi 0, %s25
      %s28 = sphi 0, %s26
      %s40 = sphi 0, %s42
      %s43 = sphi 0, %s40
      %s44 = sphi 0, %s43
      %s60 = sphi 0, %s44
      %s68 = sphi 0, %s70
      %s71 = sphi 0, %s68
      %s72 = sphi 0, %s71
      %s88 = sphi 0, %s72
      %s92 = sphi 0, %s92
      %s94 = sphi 0, %s92
      %s95 = sphi 0, %s94
      %s109 = sphi 0, %s95
      %s113 = sphi 0, %s113
      %s115 = sphi 0, %s113
      %s116 = sphi 0, %s115
      %s130 = sphi 0, %s116
      %s134 = sphi 0, %s134
      %s136 = sphi 0, %s134
      %s137 = sphi 0, %s136
      %s151 = sphi 0, %s137
      %s155 = sphi 0, %s155
      %s157 = sphi 0, %s155
      %s158 = sphi 0, %s157
      %s172 = sphi 0, %s158
      %s180 = sphi 0, %s182
      %s183 = sphi 0, %s180
      %s184 = sphi 0, %s183
      %s200 = sphi 0, %s184
    $region4: #{tpu_custom_call.1} parent=1 // loop_header_branch
      %19 = sbr.rel (%p17) target = $region8
    $region5: #{tpu_custom_call.1} parent=1 // loop_body
      %s21 = ssub.s32 %s16, 1
      %s22 = ssub.s32 %s16, 2
      %s29 = sadd.s32 1, %s24
      %p30 = scmp.ge.s32.totalorder %s29, 2
      %s31 = scalar_select %p30, 0, %s29
      %s32 = sadd.s32 1, %s23
      %s33 = scalar_select %p30, %s32, %s23
      %p34 = scmp.ge.s32.totalorder %s33, 2
      %s35 = scalar_select %p34, 0, %s33
      %s36 = ssub.s32 %s23, %s35
      %s37 = ssub.s32 %s24, %s31
      %s38 = sor.u32 %s36, %s37
      %p39 = scmp.eq.s32.totalorder %s38, 0
      %s41 = sadd.s32 %s40, 1
      %s42 = scalar_select %p39, %s40, %s41
      %p45 = pneg %p39
      %p46 = scmp.eq.s32.totalorder %s16, 3
      %p47 = por %p45, %p46
      %p48 = scmp.ne.s32.totalorder %s40, %s43
      %p49 = scmp.eq.s32.totalorder %s16, 0
      %p50 = por %p48, %p49
      %p51 = scmp.ne.s32.totalorder %s40, %s43
      %p52 = scmp.eq.s32.totalorder %s21, 3
      %p53 = por %p51, %p52
      %p54 = scmp.ne.s32.totalorder %s43, %s44
      %p55 = scmp.eq.s32.totalorder %s21, 0
      %p56 = por %p54, %p55
      %p57 = scmp.ne.s32.totalorder %s43, %s44
      %p58 = scmp.eq.s32.totalorder %s22, 3
      %p59 = por %p57, %p58
      %p61 = scmp.ne.s32.totalorder %s44, %s60
      %p62 = scmp.eq.s32.totalorder %s22, 0
      %p63 = por %p61, %p62
      %s64 = ssub.s32 %s23, %s35
      %s65 = ssub.s32 %s24, %s31
      %s66 = sor.u32 %s64, %s65
      %p67 = scmp.eq.s32.totalorder %s66, 0
      %s69 = sadd.s32 %s68, 1
      %s70 = scalar_select %p67, %s68, %s69
      %p73 = pneg %p67
      %p74 = scmp.eq.s32.totalorder %s16, 3
      %p75 = por %p73, %p74
      %p76 = scmp.ne.s32.totalorder %s68, %s71
      %p77 = scmp.eq.s32.totalorder %s16, 0
      %p78 = por %p76, %p77
      %p79 = scmp.ne.s32.totalorder %s68, %s71
      %p80 = scmp.eq.s32.totalorder %s21, 3
      %p81 = por %p79, %p80
      %p82 = scmp.ne.s32.totalorder %s71, %s72
      %p83 = scmp.eq.s32.totalorder %s21, 0
      %p84 = por %p82, %p83
      %p85 = scmp.ne.s32.totalorder %s71, %s72
      %p86 = scmp.eq.s32.totalorder %s22, 3
      %p87 = por %p85, %p86
      %p89 = scmp.ne.s32.totalorder %s72, %s88
      %p90 = scmp.eq.s32.totalorder %s22, 0
      %p91 = por %p89, %p90
      %s93 = sadd.s32 %s92, 1
      %p96 = scmp.eq.s32.totalorder %s16, 3
      %p97 = scmp.ne.s32.totalorder %s92, %s94
      %p98 = scmp.eq.s32.totalorder %s16, 0
      %p99 = por %p97, %p98
      %p100 = scmp.ne.s32.totalorder %s92, %s94
      %p101 = scmp.eq.s32.totalorder %s21, 3
      %p102 = por %p100, %p101
      %p103 = scmp.ne.s32.totalorder %s94, %s95
      %p104 = scmp.eq.s32.totalorder %s21, 0
      %p105 = por %p103, %p104
      %p106 = scmp.ne.s32.totalorder %s94, %s95
      %p107 = scmp.eq.s32.totalorder %s22, 3
      %p108 = por %p106, %p107
      %p110 = scmp.ne.s32.totalorder %s95, %s109
      %p111 = scmp.eq.s32.totalorder %s22, 0
      %p112 = por %p110, %p111
      %s114 = sadd.s32 %s113, 1
      %p117 = scmp.eq.s32.totalorder %s16, 3
      %p118 = scmp.ne.s32.totalorder %s113, %s115
      %p119 = scmp.eq.s32.totalorder %s16, 0
      %p120 = por %p118, %p119
      %p121 = scmp.ne.s32.totalorder %s113, %s115
      %p122 = scmp.eq.s32.totalorder %s21, 3
      %p123 = por %p121, %p122
      %p124 = scmp.ne.s32.totalorder %s115, %s116
      %p125 = scmp.eq.s32.totalorder %s21, 0
      %p126 = por %p124, %p125
      %p127 = scmp.ne.s32.totalorder %s115, %s116
      %p128 = scmp.eq.s32.totalorder %s22, 3
      %p129 = por %p127, %p128
      %p131 = scmp.ne.s32.totalorder %s116, %s130
      %p132 = scmp.eq.s32.totalorder %s22, 0
      %p133 = por %p131, %p132
      %s135 = sadd.s32 %s134, 1
      %p138 = scmp.eq.s32.totalorder %s16, 3
      %p139 = scmp.ne.s32.totalorder %s134, %s136
      %p140 = scmp.eq.s32.totalorder %s16, 0
      %p141 = por %p139, %p140
      %p142 = scmp.ne.s32.totalorder %s134, %s136
      %p143 = scmp.eq.s32.totalorder %s21, 3
      %p144 = por %p142, %p143
      %p145 = scmp.ne.s32.totalorder %s136, %s137
      %p146 = scmp.eq.s32.totalorder %s21, 0
      %p147 = por %p145, %p146
      %p148 = scmp.ne.s32.totalorder %s136, %s137
      %p149 = scmp.eq.s32.totalorder %s22, 3
      %p150 = por %p148, %p149
      %p152 = scmp.ne.s32.totalorder %s137, %s151
      %p153 = scmp.eq.s32.totalorder %s22, 0
      %p154 = por %p152, %p153
      %s156 = sadd.s32 %s155, 1
      %p159 = scmp.eq.s32.totalorder %s16, 3
      %p160 = scmp.ne.s32.totalorder %s155, %s157
      %p161 = scmp.eq.s32.totalorder %s16, 0
      %p162 = por %p160, %p161
      %p163 = scmp.ne.s32.totalorder %s155, %s157
      %p164 = scmp.eq.s32.totalorder %s21, 3
      %p165 = por %p163, %p164
      %p166 = scmp.ne.s32.totalorder %s157, %s158
      %p167 = scmp.eq.s32.totalorder %s21, 0
      %p168 = por %p166, %p167
      %p169 = scmp.ne.s32.totalorder %s157, %s158
      %p170 = scmp.eq.s32.totalorder %s22, 3
      %p171 = por %p169, %p170
      %p173 = scmp.ne.s32.totalorder %s158, %s172
      %p174 = scmp.eq.s32.totalorder %s22, 0
      %p175 = por %p173, %p174
      %s176 = ssub.s32 %s23, %s35
      %s177 = ssub.s32 %s24, %s31
      %s178 = sor.u32 %s176, %s177
      %p179 = scmp.eq.s32.totalorder %s178, 0
      %s181 = sadd.s32 %s180, 1
      %s182 = scalar_select %p179, %s180, %s181
      %p185 = pneg %p179
      %p186 = scmp.eq.s32.totalorder %s16, 3
      %p187 = por %p185, %p186
      %p188 = scmp.ne.s32.totalorder %s180, %s183
      %p189 = scmp.eq.s32.totalorder %s16, 0
      %p190 = por %p188, %p189
      %p191 = scmp.ne.s32.totalorder %s180, %s183
      %p192 = scmp.eq.s32.totalorder %s21, 3
      %p193 = por %p191, %p192
      %p194 = scmp.ne.s32.totalorder %s183, %s184
      %p195 = scmp.eq.s32.totalorder %s21, 0
      %p196 = por %p194, %p195
      %p197 = scmp.ne.s32.totalorder %s183, %s184
      %p198 = scmp.eq.s32.totalorder %s22, 3
      %p199 = por %p197, %p198
      %p201 = scmp.ne.s32.totalorder %s184, %s200
      %p202 = scmp.eq.s32.totalorder %s22, 0
      %p203 = por %p201, %p202
      %p204 = scmp.le.s32.totalorder 1, %s16
      %p205 = scmp.lt.s32.totalorder %s16, 5
      %p206 = pnand %p204, %p205
      %p207 = pneg %p206
      // Predicated region
      $region9: #{tpu_custom_call.1} parent=5 // pred_check
        _
      $region10: #{tpu_custom_call.1} parent=5 // pred_check_branch
        %209 = sbr.rel (%p206) target = $region12
      $region11: #{tpu_custom_call.1} parent=5 // pred_region
        %s210 = ssub.s32 %s16, 1
        // Predicated region
        $region13: #{tpu_custom_call.1} parent=11 // pred_check
          %p211 = pneg %p105
        $region14: #{tpu_custom_call.1} parent=11 // pred_check_branch
          %213 = sbr.rel (%p211) target = $region16
        $region15: #{tpu_custom_call.1} parent=11 // pred_region
          _
        $region16: #{tpu_custom_call.1} parent=11 // pred_fallthru
          _
        // Predicated region
        $region17: #{tpu_custom_call.1} parent=11 // pred_check
          %p214 = pneg %p126
        $region18: #{tpu_custom_call.1} parent=11 // pred_check_branch
          %216 = sbr.rel (%p214) target = $region20
        $region19: #{tpu_custom_call.1} parent=11 // pred_region
          %s218 = ssub.s32 3072, 3072
          %219 = vsyncadd [#allocation4], %s218
          %s220 = sshll.u32 [#allocation3], 4
          %s221 = int_to_ptr.vmem [resolvable:$true] %s220
          %226 = dma.hbm_to_vmem [thread:$0]  %s3, 3072, %s221, [#allocation4], 64, 64, 4
        $region20: #{tpu_custom_call.1} parent=11 // pred_fallthru
          _
        // Predicated region
        $region21: #{tpu_custom_call.1} parent=11 // pred_check
          %p227 = pneg %p147
        $region22: #{tpu_custom_call.1} parent=11 // pred_check_branch
          %229 = sbr.rel (%p227) target = $region24
        $region23: #{tpu_custom_call.1} parent=11 // pred_region
          _
        $region24: #{tpu_custom_call.1} parent=11 // pred_fallthru
          _
        // Predicated region
        $region25: #{tpu_custom_call.1} parent=11 // pred_check
          %p230 = pneg %p168
        $region26: #{tpu_custom_call.1} parent=11 // pred_check_branch
          %232 = sbr.rel (%p230) target = $region28
        $region27: #{tpu_custom_call.1} parent=11 // pred_region
          _
        $region28: #{tpu_custom_call.1} parent=11 // pred_fallthru
          _
      $region12: #{tpu_custom_call.1} parent=5 // pred_fallthru
        _
      %p233 = scmp.lt.s32.totalorder %s16, 4
      // Predicated region
      $region29: #{tpu_custom_call.1} parent=5 // pred_check
        %p234 = pneg %p233
      $region30: #{tpu_custom_call.1} parent=5 // pred_check_branch
        %236 = sbr.rel (%p234) target = $region32
      $region31: #{tpu_custom_call.1} parent=5 // pred_region
        // Predicated region
        $region33: #{tpu_custom_call.1} parent=31 // pred_check
          %p237 = pneg %p50
        $region34: #{tpu_custom_call.1} parent=31 // pred_check_branch
          %239 = sbr.rel (%p237) target = $region36
        $region35: #{tpu_custom_call.1} parent=31 // pred_region
          %p240 = scmp.lt.s32.totalorder %s23, 1
          %s241 = scalar_select %p240, %s23, 1
          %p242 = scmp.lt.s32.totalorder %s24, 1
          %s243 = scalar_select %p242, %s24, 1
          %s244 = smul.addr %s241, 2
          %s245 = sadd.s32 %s243, %s244
          %s246 = smul.addr %s245, 4
          %s247 = scalar_lea.vmem %s0, %s246
        $region36: #{tpu_custom_call.1} parent=31 // pred_fallthru
          _
        // Predicated region
        $region37: #{tpu_custom_call.1} parent=31 // pred_check
          %p248 = pneg %p78
        $region38: #{tpu_custom_call.1} parent=31 // pred_check_branch
          %250 = sbr.rel (%p248) target = $region40
        $region39: #{tpu_custom_call.1} parent=31 // pred_region
          %p251 = scmp.lt.s32.totalorder %s23, 1
          %s252 = scalar_select %p251, %s23, 1
          %p253 = scmp.lt.s32.totalorder %s24, 1
          %s254 = scalar_select %p253, %s24, 1
          %s255 = smul.addr %s252, 2
          %s256 = sadd.s32 %s254, %s255
          %s257 = smul.addr %s256, 4
          %s258 = scalar_lea.vmem %s1, %s257
        $region40: #{tpu_custom_call.1} parent=31 // pred_fallthru
          _
      $region32: #{tpu_custom_call.1} parent=5 // pred_fallthru
        _
      %p259 = scmp.le.s32.totalorder 1, %s16
      %p260 = scmp.lt.s32.totalorder %s16, 5
      %p261 = pnand %p259, %p260
      %p262 = pneg %p261
      // Predicated region
      $region41: #{tpu_custom_call.1} parent=5 // pred_check
        _
      $region42: #{tpu_custom_call.1} parent=5 // pred_check_branch
        %264 = sbr.rel (%p261) target = $region44
      $region43: #{tpu_custom_call.1} parent=5 // pred_region
        %s265 = ssub.s32 %s16, 1
        // Predicated region
        $region45: #{tpu_custom_call.1} parent=43 // pred_check
          %p266 = pneg %p126
        $region46: #{tpu_custom_call.1} parent=43 // pred_check_branch
          %268 = sbr.rel (%p266) target = $region48
        $region47: #{tpu_custom_call.1} parent=43 // pred_region
          %269 = dma.done [#allocation4], 3072
        $region48: #{tpu_custom_call.1} parent=43 // pred_fallthru
          _
        %p270 = scmp.lt.s32.totalorder %s25, 1
        %s271 = scalar_select %p270, %s25, 1
        %p272 = scmp.lt.s32.totalorder %s26, 1
        %s273 = scalar_select %p272, %s26, 1
        %s274 = smul.addr %s271, 2
        %s275 = sadd.s32 %s273, %s274
        %s276 = smul.addr %s275, 4
        %s277 = scalar_lea.vmem %s0, %s276
        %p278 = pneg %p56
        %p279 = pneg %p53
        %p280 = scmp.lt.s32.totalorder %s25, 1
        %s281 = scalar_select %p280, %s25, 1
        %p282 = scmp.lt.s32.totalorder %s26, 1
        %s283 = scalar_select %p282, %s26, 1
        %s284 = smul.addr %s281, 2
        %s285 = sadd.s32 %s283, %s284
        %s286 = smul.addr %s285, 4
        %s287 = scalar_lea.vmem %s1, %s286
        %p288 = pneg %p84
        %p289 = pneg %p81
        %p290 = pneg %p105
        %p291 = pneg %p102
        %p292 = pneg %p126
        %p293 = pneg %p123
        %p294 = pneg %p147
        %p295 = pneg %p144
        %p296 = pneg %p168
        %p297 = pneg %p165
        %p298 = pneg %p196
        %p299 = pneg %p193
        %s300 = sand.u32 %s183, 1
        %s301 = scalar_lea.sflag [#allocation5], %s300
        %s302 = sand.u32 %s183, 1
        %s303 = smul.addr %s302, 8
        %s304 = scalar_lea.vmem [#allocation6], %s303
        %p305 = scmp.lt.s32.totalorder %s25, 1
        %s306 = scalar_select %p305, %s25, 1
        %p307 = scmp.lt.s32.totalorder %s26, 1
        %s308 = scalar_select %p307, %s26, 1
        %s309 = smul.addr %s306, 2
        %s310 = sadd.s32 %s308, %s309
        %s311 = smul.addr %s310, 4
        %s312 = scalar_lea.vmem %s0, %s311
        %p313 = scmp.lt.s32.totalorder %s25, 1
        %s314 = scalar_select %p313, %s25, 1
        %p315 = scmp.lt.s32.totalorder %s26, 1
        %s316 = scalar_select %p315, %s26, 1
        %s317 = smul.addr %s314, 2
        %s318 = sadd.s32 %s316, %s317
        %s319 = smul.addr %s318, 4
        %s320 = scalar_lea.vmem %s1, %s319
        %p322 = scmp.eq.s32.totalorder %s26, 0
        %v323 = vld [vmem:[%s5] sm:$0x7]
        %v324 = vld [vmem:[%s312] sm:$0xf]
        %v325 = vld [vmem:[%s320] sm:$0xf]
        %v327 = vunpack.c.l.b16 %v325
        %v328 = vpack.c.b16 %v327, %v327
        %vm329 = vcmask 1043456
        %v332 = vsel %vm329, %v324, %v328
        %v334 = vrot.slane %v332, 1
        %335 = vrot.lane.b32.xlu0 %v334, 4
        %v336 = vpop.permute.xlu0 %335
        %v337 = vrot.slane %v332, 2
        %338 = vrot.lane.b32.xlu0 %v337, 8
        %v339 = vpop.permute.xlu0 %338
        %vm340 = vcmask 31744
        %v342 = vsel %vm340, %v332, %v336
        %vm343 = vcmask 64512
        %v345 = vsel %vm343, %v342, %v339
        %v346 = vld [vmem:[%s2] sm:$0xf]
        %v347 = vld [vmem:[%s2 + $0x4] sm:$0x3]
        %v348 = vlaneseq
        %v349 = vshrl.u32 %v348, 7
        %v350 = vsub.s32 0, %v349
        %v351 = vrot.slane %v323, %v350
        %v354 = vunpack.c.l.b16 %v346
        %v355 = vunpack.c.l.b16 %v347
        %v356 = vpack.c.b16 %v355, %v354
        %vm357 = vcmask 97280
        %v358 = vsel %vm357, %v345, 0
        %vm360 = vcmask 1045504
        %v362 = vsel %vm360, %v356, 0
        %364 = vmatprep.subr.bf16.mxu0 0
        %365 = vmatpush1.bf16.msra.mxu0 %v362
        %366 = vmatprep.subr.bf16.mxu0 0
        %367 = vmatpush1.bf16.msra.mxu0 0
        %368 = vmatprep.subr.bf16.mxu0 0
        %369 = vmatpush1.bf16.msra.mxu0 0
        %370 = vmatprep.subr.bf16.mxu0 0
        %371 = vmatpush1.bf16.msra.mxu0 0
        %372 = vmatprep.subr.bf16.mxu0 0
        %373 = vmatpush1.bf16.msra.mxu0 0
        %374 = vmatprep.subr.bf16.mxu0 0
        %375 = vmatpush1.bf16.msra.mxu0 0
        %376 = vmatprep.subr.bf16.mxu0 0
        %377 = vmatpush1.bf16.msra.mxu0 0
        %378 = vmatprep.subr.bf16.mxu0 0
        %379 = vmatpush1.bf16.msra.mxu0 0
        %380 = vmatprep.subr.bf16.mxu0 0
        %381 = vmatpush1.bf16.msra.mxu0 0
        %382 = vmatprep.subr.bf16.mxu0 0
        %383 = vmatpush1.bf16.msra.mxu0 0
        %384 = vmatprep.subr.bf16.mxu0 0
        %385 = vmatpush1.bf16.msra.mxu0 0
        %386 = vmatprep.subr.bf16.mxu0 0
        %387 = vmatpush1.bf16.msra.mxu0 0
        %388 = vmatprep.subr.bf16.mxu0 0
        %389 = vmatpush1.bf16.msra.mxu0 0
        %390 = vmatprep.subr.bf16.mxu0 0
        %391 = vmatpush1.bf16.msra.mxu0 0
        %392 = vmatprep.subr.bf16.mxu0 0
        %393 = vmatpush1.bf16.msra.mxu0 0
        %394 = vmatprep.subr.bf16.mxu0 0
        %395 = vmatpush1.bf16.msra.mxu0 0
        %396 = vmatprep.mubr.bf16.mxu0 0
        %397 = vmatmul.mubr.bf16.gmra.mrb[0].mxu0 %v358
        %v398 = vpop.f32.mrb[0].mxu0
        %v399 = vadd.f32 %v351, %v398
        %v400 = vpop.f32.mrb[0].mxu0
        %v401 = vpop.f32.mrb[0].mxu0
        %v402 = vadd.f32 %v351, %v401
        %v403 = vpop.f32.mrb[0].mxu0
        %404 = vdwg.mxu0
        %v405 = vmax.f32 %v399, 0.0
        %v406 = vmax.f32 %v402, 0.0
        %v407 = vpack.c.bf16 %v406, %v405
        %v409 = vunpack.c.l.b16 %v407
        %v410 = vunpack.c.h.b16 %v407
        %v411 = vpack.c.b16 %v409, %v409
        %v412 = vpack.c.b16 %v410, %v410
        %415 = vst [vmem:[#allocation2] sm:$0xf] %v411
        %416 = vst [vmem:[#allocation2 + $0x4] sm:$0x3] %v412
        // Predicated region
        $region49: #{tpu_custom_call.1} parent=43 // pred_check
          %p417 = pneg %p322
        $region50: #{tpu_custom_call.1} parent=43 // pred_check_branch
          %419 = sbr.rel (%p417) target = $region52
        $region51: #{tpu_custom_call.1} parent=43 // pred_region
          %420 = vst [vmem:[#allocation2] sm:$0xf] 0
        $region52: #{tpu_custom_call.1} parent=43 // pred_fallthru
          _
        %v421 = vld [vmem:[#allocation2] sm:$0xf]
        %v422 = vld [vmem:[#allocation2] sm:$0xe]
        %v423 = vld [vmem:[#allocation2 + $0x4] sm:$0x1]
        %v424 = vld [vmem:[#allocation2] sm:$0xc]
        %v425 = vld [vmem:[#allocation2 + $0x4] sm:$0x3]
        %v428 = vunpack.c.l.b16 %v422
        %v429 = vunpack.c.l.b16 %v423
        %v430 = vpack.c.b16 %v429, %v428
        %v431 = vrot.slane %v430, 1
        %v435 = vunpack.c.l.b16 %v424
        %v436 = vunpack.c.l.b16 %v425
        %v437 = vpack.c.b16 %v436, %v435
        %v438 = vrot.slane %v437, 2
        %v440 = vld [vmem:[#allocation3] sm:$0xf]
        %v441 = vld [vmem:[#allocation3 + $0x4] sm:$0xf]
        %v442 = vld [vmem:[#allocation3 + $0x8] sm:$0xf]
        %v443 = vld [vmem:[#allocation3 + $0xc] sm:$0xf]
        %v444 = vld [vmem:[#allocation3 + $0x10] sm:$0xf]
        %v445 = vld [vmem:[#allocation3 + $0x14] sm:$0xf]
        %v446 = vld [vmem:[#allocation3 + $0x18] sm:$0xf]
        %v447 = vld [vmem:[#allocation3 + $0x1c] sm:$0xf]
        %v448 = vld [vmem:[#allocation3 + $0x20] sm:$0xf]
        %v449 = vld [vmem:[#allocation3 + $0x24] sm:$0xf]
        %v450 = vld [vmem:[#allocation3 + $0x28] sm:$0xf]
        %v451 = vld [vmem:[#allocation3 + $0x2c] sm:$0xf]
        %v452 = vld [vmem:[#allocation3 + $0x30] sm:$0xf]
        %v453 = vld [vmem:[#allocation3 + $0x34] sm:$0xf]
        %v454 = vld [vmem:[#allocation3 + $0x38] sm:$0xf]
        %v455 = vld [vmem:[#allocation3 + $0x3c] sm:$0xf]
        %v456 = vld [vmem:[#allocation3 + $0x40] sm:$0xf]
        %v457 = vld [vmem:[#allocation3 + $0x44] sm:$0xf]
        %v458 = vld [vmem:[#allocation3 + $0x48] sm:$0xf]
        %v459 = vld [vmem:[#allocation3 + $0x4c] sm:$0xf]
        %v460 = vld [vmem:[#allocation3 + $0x50] sm:$0xf]
        %v461 = vld [vmem:[#allocation3 + $0x54] sm:$0xf]
        %v462 = vld [vmem:[#allocation3 + $0x58] sm:$0xf]
        %v463 = vld [vmem:[#allocation3 + $0x5c] sm:$0xf]
        %v464 = vld [vmem:[#allocation3 + $0x60] sm:$0xf]
        %v465 = vld [vmem:[#allocation3 + $0x64] sm:$0xf]
        %v466 = vld [vmem:[#allocation3 + $0x68] sm:$0xf]
        %v467 = vld [vmem:[#allocation3 + $0x6c] sm:$0xf]
        %v468 = vld [vmem:[#allocation3 + $0x70] sm:$0xf]
        %v469 = vld [vmem:[#allocation3 + $0x74] sm:$0xf]
        %v470 = vld [vmem:[#allocation3 + $0x78] sm:$0xf]
        %v471 = vld [vmem:[#allocation3 + $0x7c] sm:$0xf]
        %v472 = vld [vmem:[#allocation3 + $0x80] sm:$0xf]
        %v473 = vld [vmem:[#allocation3 + $0x84] sm:$0xf]
        %v474 = vld [vmem:[#allocation3 + $0x88] sm:$0xf]
        %v475 = vld [vmem:[#allocation3 + $0x8c] sm:$0xf]
        %v476 = vld [vmem:[#allocation3 + $0x90] sm:$0xf]
        %v477 = vld [vmem:[#allocation3 + $0x94] sm:$0xf]
        %v478 = vld [vmem:[#allocation3 + $0x98] sm:$0xf]
        %v479 = vld [vmem:[#allocation3 + $0x9c] sm:$0xf]
        %v480 = vld [vmem:[#allocation3 + $0xa0] sm:$0xf]
        %v481 = vld [vmem:[#allocation3 + $0xa4] sm:$0xf]
        %v482 = vld [vmem:[#allocation3 + $0xa8] sm:$0xf]
        %v483 = vld [vmem:[#allocation3 + $0xac] sm:$0xf]
        %v484 = vld [vmem:[#allocation3 + $0xb0] sm:$0xf]
        %v485 = vld [vmem:[#allocation3 + $0xb4] sm:$0xf]
        %v486 = vld [vmem:[#allocation3 + $0xb8] sm:$0xf]
        %v487 = vld [vmem:[#allocation3 + $0xbc] sm:$0xf]
        %v488 = vlaneseq
        %v489 = vshrl.u32 %v488, 7
        %v490 = vsub.s32 1, %v489
        %v491 = vrot.slane %v323, %v490
        %v540 = vunpack.c.l.b16 %v440
        %v541 = vunpack.c.l.b16 %v441
        %v542 = vunpack.c.l.b16 %v442
        %v543 = vunpack.c.l.b16 %v443
        %v544 = vunpack.c.l.b16 %v444
        %v545 = vunpack.c.l.b16 %v445
        %v546 = vunpack.c.l.b16 %v446
        %v547 = vunpack.c.l.b16 %v447
        %v548 = vunpack.c.l.b16 %v448
        %v549 = vunpack.c.l.b16 %v449
        %v550 = vunpack.c.l.b16 %v450
        %v551 = vunpack.c.l.b16 %v451
        %v552 = vunpack.c.l.b16 %v452
        %v553 = vunpack.c.l.b16 %v453
        %v554 = vunpack.c.l.b16 %v454
        %v555 = vunpack.c.l.b16 %v455
        %v556 = vunpack.c.l.b16 %v456
        %v557 = vunpack.c.l.b16 %v457
        %v558 = vunpack.c.l.b16 %v458
        %v559 = vunpack.c.l.b16 %v459
        %v560 = vunpack.c.l.b16 %v460
        %v561 = vunpack.c.l.b16 %v461
        %v562 = vunpack.c.l.b16 %v462
        %v563 = vunpack.c.l.b16 %v463
        %v564 = vunpack.c.l.b16 %v464
        %v565 = vunpack.c.l.b16 %v465
        %v566 = vunpack.c.l.b16 %v466
        %v567 = vunpack.c.l.b16 %v467
        %v568 = vunpack.c.l.b16 %v468
        %v569 = vunpack.c.l.b16 %v469
        %v570 = vunpack.c.l.b16 %v470
        %v571 = vunpack.c.l.b16 %v471
        %v572 = vunpack.c.l.b16 %v472
        %v573 = vunpack.c.l.b16 %v473
        %v574 = vunpack.c.l.b16 %v474
        %v575 = vunpack.c.l.b16 %v475
        %v576 = vunpack.c.l.b16 %v476
        %v577 = vunpack.c.l.b16 %v477
        %v578 = vunpack.c.l.b16 %v478
        %v579 = vunpack.c.l.b16 %v479
        %v580 = vunpack.c.l.b16 %v480
        %v581 = vunpack.c.l.b16 %v481
        %v582 = vunpack.c.l.b16 %v482
        %v583 = vunpack.c.l.b16 %v483
        %v584 = vunpack.c.l.b16 %v484
        %v585 = vunpack.c.l.b16 %v485
        %v586 = vunpack.c.l.b16 %v486
        %v587 = vunpack.c.l.b16 %v487
        %v588 = vpack.c.b16 %v541, %v540
        %v589 = vpack.c.b16 %v543, %v542
        %v590 = vpack.c.b16 %v545, %v544
        %v591 = vpack.c.b16 %v547, %v546
        %v592 = vpack.c.b16 %v549, %v548
        %v593 = vpack.c.b16 %v551, %v550
        %v594 = vpack.c.b16 %v553, %v552
        %v595 = vpack.c.b16 %v555, %v554
        %v596 = vpack.c.b16 %v557, %v556
        %v597 = vpack.c.b16 %v559, %v558
        %v598 = vpack.c.b16 %v561, %v560
        %v599 = vpack.c.b16 %v563, %v562
        %v600 = vpack.c.b16 %v565, %v564
        %v601 = vpack.c.b16 %v567, %v566
        %v602 = vpack.c.b16 %v569, %v568
        %v603 = vpack.c.b16 %v571, %v570
        %v604 = vpack.c.b16 %v573, %v572
        %v605 = vpack.c.b16 %v575, %v574
        %v606 = vpack.c.b16 %v577, %v576
        %v607 = vpack.c.b16 %v579, %v578
        %v608 = vpack.c.b16 %v581, %v580
        %v609 = vpack.c.b16 %v583, %v582
        %v610 = vpack.c.b16 %v585, %v584
        %v611 = vpack.c.b16 %v587, %v586
        %636 = vmatprep.subr.bf16.mxu0 0
        %637 = vmatpush1.bf16.msra.mxu0 %v588
        %638 = vmatprep.subr.bf16.mxu0 0
        %639 = vmatpush1.bf16.msra.mxu0 %v589
        %640 = vmatprep.subr.bf16.mxu0 0
        %641 = vmatpush1.bf16.msra.mxu0 %v590
        %642 = vmatprep.subr.bf16.mxu0 0
        %643 = vmatpush1.bf16.msra.mxu0 %v591
        %644 = vmatprep.subr.bf16.mxu0 0
        %645 = vmatpush1.bf16.msra.mxu0 %v592
        %646 = vmatprep.subr.bf16.mxu0 0
        %647 = vmatpush1.bf16.msra.mxu0 %v593
        %648 = vmatprep.subr.bf16.mxu0 0
        %649 = vmatpush1.bf16.msra.mxu0 %v594
        %650 = vmatprep.subr.bf16.mxu0 0
        %651 = vmatpush1.bf16.msra.mxu0 %v595
        %652 = vmatprep.subr.bf16.mxu0 0
        %653 = vmatpush1.bf16.msra.mxu0 %v596
        %654 = vmatprep.subr.bf16.mxu0 0
        %655 = vmatpush1.bf16.msra.mxu0 %v597
        %656 = vmatprep.subr.bf16.mxu0 0
        %657 = vmatpush1.bf16.msra.mxu0 %v598
        %658 = vmatprep.subr.bf16.mxu0 0
        %659 = vmatpush1.bf16.msra.mxu0 %v599
        %660 = vmatprep.subr.bf16.mxu0 0
        %661 = vmatpush1.bf16.msra.mxu0 %v600
        %662 = vmatprep.subr.bf16.mxu0 0
        %663 = vmatpush1.bf16.msra.mxu0 %v601
        %664 = vmatprep.subr.bf16.mxu0 0
        %665 = vmatpush1.bf16.msra.mxu0 %v602
        %666 = vmatprep.subr.bf16.mxu0 0
        %667 = vmatpush1.bf16.msra.mxu0 %v603
        %668 = vmatprep.mubr.bf16.mxu0 %v431
        %669 = vmatmul.mubr.bf16.gmra.mrb[0].mxu0 %v421
        %v670 = vpop.f32.mrb[0].mxu0
        %v671 = vadd.f32 %v491, %v670
        %v672 = vpop.f32.mrb[0].mxu0
        %v673 = vpop.f32.mrb[0].mxu0
        %v674 = vpop.f32.mrb[0].mxu0
        %675 = vdwg.mxu0
        %676 = vmatprep.subr.bf16.mxu0 0
        %677 = vmatpush1.bf16.msra.mxu0 %v604
        %678 = vmatprep.subr.bf16.mxu0 0
        %679 = vmatpush1.bf16.msra.mxu0 %v605
        %680 = vmatprep.subr.bf16.mxu0 0
        %681 = vmatpush1.bf16.msra.mxu0 %v606
        %682 = vmatprep.subr.bf16.mxu0 0
        %683 = vmatpush1.bf16.msra.mxu0 %v607
        %684 = vmatprep.subr.bf16.mxu0 0
        %685 = vmatpush1.bf16.msra.mxu0 %v608
        %686 = vmatprep.subr.bf16.mxu0 0
        %687 = vmatpush1.bf16.msra.mxu0 %v609
        %688 = vmatprep.subr.bf16.mxu0 0
        %689 = vmatpush1.bf16.msra.mxu0 %v610
        %690 = vmatprep.subr.bf16.mxu0 0
        %691 = vmatpush1.bf16.msra.mxu0 %v611
        %692 = vmatprep.subr.bf16.mxu0 0
        %693 = vmatpush1.bf16.msra.mxu0 0
        %694 = vmatprep.subr.bf16.mxu0 0
        %695 = vmatpush1.bf16.msra.mxu0 0
        %696 = vmatprep.subr.bf16.mxu0 0
        %697 = vmatpush1.bf16.msra.mxu0 0
        %698 = vmatprep.subr.bf16.mxu0 0
        %699 = vmatpush1.bf16.msra.mxu0 0
        %700 = vmatprep.subr.bf16.mxu0 0
        %701 = vmatpush1.bf16.msra.mxu0 0
        %702 = vmatprep.subr.bf16.mxu0 0
        %703 = vmatpush1.bf16.msra.mxu0 0
        %704 = vmatprep.subr.bf16.mxu0 0
        %705 = vmatpush1.bf16.msra.mxu0 0
        %706 = vmatprep.subr.bf16.mxu0 0
        %707 = vmatpush1.bf16.msra.mxu0 0
        %708 = vmatprep.mubr.bf16.mxu0 0
        %709 = vmatmul.mubr.bf16.gmra.mrb[0].mxu0 %v438
        %v710 = vpop.f32.mrb[0].mxu0
        %v711 = vadd.f32 %v671, %v710
        %v712 = vpop.f32.mrb[0].mxu0
        %v713 = vpop.f32.mrb[0].mxu0
        %v714 = vpop.f32.mrb[0].mxu0
        %715 = vdwg.mxu0
        %v716 = vmax.f32 %v711, 0.0
        %v717 = vld [vmem:[%s4] sm:$0x3]
        %v718 = vlaneseq
        %v719 = vshrl.u32 %v718, 7
        %v720 = vsub.s32 2, %v719
        %v721 = vrot.slane %v323, %v720
        %v723 = vsel %vm340, %v325, 0
        %vm725 = vcmask 1041408
        %v727 = vsel %vm725, %v717, 0
        %729 = vmatprep.subr.bf16.mxu0 0
        %730 = vmatpush1.bf16.msra.mxu0 %v727
        %731 = vmatprep.subr.bf16.mxu0 0
        %732 = vmatpush1.bf16.msra.mxu0 0
        %733 = vmatprep.subr.bf16.mxu0 0
        %734 = vmatpush1.bf16.msra.mxu0 0
        %735 = vmatprep.subr.bf16.mxu0 0
        %736 = vmatpush1.bf16.msra.mxu0 0
        %737 = vmatprep.subr.bf16.mxu0 0
        %738 = vmatpush1.bf16.msra.mxu0 0
        %739 = vmatprep.subr.bf16.mxu0 0
        %740 = vmatpush1.bf16.msra.mxu0 0
        %741 = vmatprep.subr.bf16.mxu0 0
        %742 = vmatpush1.bf16.msra.mxu0 0
        %743 = vmatprep.subr.bf16.mxu0 0
        %744 = vmatpush1.bf16.msra.mxu0 0
        %745 = vmatprep.subr.bf16.mxu0 0
        %746 = vmatpush1.bf16.msra.mxu0 0
        %747 = vmatprep.subr.bf16.mxu0 0
        %748 = vmatpush1.bf16.msra.mxu0 0
        %749 = vmatprep.subr.bf16.mxu0 0
        %750 = vmatpush1.bf16.msra.mxu0 0
        %751 = vmatprep.subr.bf16.mxu0 0
        %752 = vmatpush1.bf16.msra.mxu0 0
        %753 = vmatprep.subr.bf16.mxu0 0
        %754 = vmatpush1.bf16.msra.mxu0 0
        %755 = vmatprep.subr.bf16.mxu0 0
        %756 = vmatpush1.bf16.msra.mxu0 0
        %757 = vmatprep.subr.bf16.mxu0 0
        %758 = vmatpush1.bf16.msra.mxu0 0
        %759 = vmatprep.subr.bf16.mxu0 0
        %760 = vmatpush1.bf16.msra.mxu0 0
        %761 = vmatprep.mubr.bf16.mxu0 0
        %762 = vmatmul.mubr.bf16.gmra.mrb[0].mxu0 %v723
        %v763 = vpop.f32.mrb[0].mxu0
        %v764 = vadd.f32 %v721, %v763
        %v765 = vpop.f32.mrb[0].mxu0
        %v766 = vpop.f32.mrb[0].mxu0
        %v767 = vpop.f32.mrb[0].mxu0
        %768 = vdwg.mxu0
        %v769 = vadd.f32 %v716, %v764
        %770 = vst [vmem:[%s304] sm:$0xff] %v769
        // Predicated region
        $region53: #{tpu_custom_call.1} parent=43 // pred_check
          %p771 = pneg %p322
        $region54: #{tpu_custom_call.1} parent=43 // pred_check_branch
          %773 = sbr.rel (%p771) target = $region56
        $region55: #{tpu_custom_call.1} parent=43 // pred_region
          %774 = vst [vmem:[%s304] sm:$0xf] %v764
        $region56: #{tpu_custom_call.1} parent=43 // pred_fallthru
          _
        %s775 = sand.u32 %s183, 1
        %s776 = scalar_lea.sflag [#allocation5], %s775
        %s777 = sand.u32 %s183, 1
        %s778 = smul.addr %s777, 8
        %s779 = scalar_lea.vmem [#allocation6], %s778
        // Predicated region
        $region57: #{tpu_custom_call.1} parent=43 // pred_check
          %p780 = pneg %p193
        $region58: #{tpu_custom_call.1} parent=43 // pred_check_branch
          %782 = sbr.rel (%p780) target = $region60
        $region59: #{tpu_custom_call.1} parent=43 // pred_region
          %s784 = ssub.s32 128, 128
          %785 = vsyncadd %s776, %s784
          %s786 = smul.addr %s25, 2
          %s787 = sadd.s32 %s26, %s786
          %s788 = smul.addr %s787, 128
          %s789 = scalar_lea.hbm %s6, %s788
          %s791 = sshll.u32 %s779, 4
          %s792 = int_to_ptr.vmem [resolvable:$true] %s791
          %794 = dma.vmem_to_hbm [thread:$0]  %s792, 128, %s789, %s776
        $region60: #{tpu_custom_call.1} parent=43 // pred_fallthru
          _
      $region44: #{tpu_custom_call.1} parent=5 // pred_fallthru
        _
      %p795 = scmp.le.s32.totalorder 2, %s16
      // Predicated region
      $region61: #{tpu_custom_call.1} parent=5 // pred_check
        %p796 = pneg %p795
      $region62: #{tpu_custom_call.1} parent=5 // pred_check_branch
        %798 = sbr.rel (%p796) target = $region64
      $region63: #{tpu_custom_call.1} parent=5 // pred_region
        %s799 = ssub.s32 %s16, 2
        // Predicated region
        $region65: #{tpu_custom_call.1} parent=63 // pred_check
          %p800 = pneg %p199
        $region66: #{tpu_custom_call.1} parent=63 // pred_check_branch
          %802 = sbr.rel (%p800) target = $region68
        $region67: #{tpu_custom_call.1} parent=63 // pred_region
          %s803 = sand.u32 %s184, 1
          %s804 = scalar_lea.sflag [#allocation5], %s803
          %s805 = sand.u32 %s184, 1
          %s806 = smul.addr %s805, 8
          %s807 = scalar_lea.vmem [#allocation6], %s806
          %808 = dma.done %s804, 128
        $region68: #{tpu_custom_call.1} parent=63 // pred_fallthru
          _
      $region64: #{tpu_custom_call.1} parent=5 // pred_fallthru
        _
    $region6: #{tpu_custom_call.1} parent=1 // loop_footer
      %s20 = sadd.s32 1, %s16
    $region7: #{tpu_custom_call.1} parent=1 // loop_footer_branch
      %15 = sbr.rel target = $region3
    $region8: #{tpu_custom_call.1} parent=1 // loop_exit
      _
    %809 = vsyncpa [#allocation4], 1
    %s810 = scalar_lea.sflag [#allocation4], 1
    %811 = vsyncpa %s810, 1
    %812 = vsyncpa [#allocation5], 1
    %s813 = scalar_lea.sflag [#allocation5], 1
    %814 = vsyncpa %s813, 1

</llo_original>
